<compile_context>
chip_gen: v7x
topology: tpu7x:2x2x1
jax: 0.10.0
libtpu: 0.0.40
codegen_flags: <defaults>
</compile_context>

<pallas_src>
import math
import functools

import jax
import jax.numpy as jnp
from jax import lax
from jax.experimental import pallas as pl
from jax.experimental.pallas import tpu as pltpu


def _layer_norm(x, gamma, beta, eps=1e-5):
    mean = jnp.mean(x, axis=-1, keepdims=True)
    var = jnp.mean((x - mean) ** 2, axis=-1, keepdims=True)   # biased, like nn.LayerNorm
    return (x - mean) * lax.rsqrt(var + eps) * gamma + beta


def _gelu_exact(x):
    # PyTorch nn.GELU() default: exact erf-based GELU
    return 0.5 * x * (1.0 + lax.erf(x * (1.0 / math.sqrt(2.0))))


def tst_encoder_layer_kernel(
    x_ref,
    wqkv_ref, bqkv_ref, wo_ref, bo_ref,
    g1_ref, be1_ref,
    w1_ref, b1_ref, w2_ref, b2_ref,
    g2_ref, be2_ref,
    o_ref,
    *, n_heads, d_k,
):
    tb, L, D = x_ref.shape
    H = n_heads
    N = tb * L

    # Fold the batch block into the row dim -> one big lane-dense 2D slab.
    x = x_ref[...].reshape(N, D)                       # (N, D) f32
    x_bf = x.astype(jnp.bfloat16)

    # ---- Multi-head self-attention ----
    # Fused QKV projection: single (N, D) @ (D, 3D) bf16 matmul, f32 accumulation.
    qkv = jnp.dot(x_bf, wqkv_ref[...],
                  preferred_element_type=jnp.float32) + bqkv_ref[...]   # (N, 3D) f32

    scale = 1.0 / math.sqrt(d_k)
    q = qkv[:, :D] * scale        # fold 1/sqrt(d_k) into q (N x D) instead of scores (L x L)
    k = qkv[:, D:2 * D]
    v = qkv[:, 2 * D:]

    # Head split: (N, D) -> (H*tb, L, d_k) using static lane slices + axis-0 concat
    # (avoids lane-splitting reshapes / >2D transposes).
    def split_heads(t):
        t3 = t.astype(jnp.bfloat16).reshape(tb, L, D)
        return jnp.concatenate(
            [t3[:, :, h * d_k:(h + 1) * d_k] for h in range(H)], axis=0)

    qh = split_heads(q)           # (H*tb, L, d_k) bf16
    kh = split_heads(k)
    vh = split_heads(v)

    # Batched attention over all (head, batch) pairs in one contraction each;
    # contraction on the last dim of both operands -> no explicit K transpose.
    # TODO(synk): for long q_len, tile the sequence (flash-style online softmax)
    # instead of materializing the full (L, L) score matrix per head.
    s = jnp.einsum('bld,bmd->blm', qh, kh,
                   preferred_element_type=jnp.float32)               # (H*tb, L, L) f32
    s = s - jnp.max(s, axis=-1, keepdims=True)
    p = jnp.exp(s)
    p = p * pl.reciprocal(jnp.sum(p, axis=-1, keepdims=True), approx=True)
    ctx = jnp.einsum('blm,bmd->bld', p.astype(jnp.bfloat16), vh,
                     preferred_element_type=jnp.float32)              # (H*tb, L, d_k) f32

    # Merge heads back: (H*tb, L, d_k) -> (tb, L, D) -> (N, D)
    attn = jnp.concatenate(
        [ctx[h * tb:(h + 1) * tb] for h in range(H)], axis=-1)        # (tb, L, D)
    attn = attn.reshape(N, D)

    src2 = jnp.dot(attn.astype(jnp.bfloat16), wo_ref[...],
                   preferred_element_type=jnp.float32) + bo_ref[...]

    # residual + LayerNorm (post-norm), f32
    src = _layer_norm(x + src2, g1_ref[...], be1_ref[...])

    # ---- Position-wise feed-forward ----
    # TODO(synk): for large d_model/d_ff, keep w1/w2 in HBM (memory_space=pl.ANY)
    # and K-split them with pltpu.emit_pipeline instead of holding them in VMEM.
    h1 = jnp.dot(src.astype(jnp.bfloat16), w1_ref[...],
                 preferred_element_type=jnp.float32) + b1_ref[...]
    h1 = _gelu_exact(h1)
    ff = jnp.dot(h1.astype(jnp.bfloat16), w2_ref[...],
                 preferred_element_type=jnp.float32) + b2_ref[...]

    out = _layer_norm(src + ff, g2_ref[...], be2_ref[...])

    o_ref[...] = out.reshape(tb, L, D).astype(o_ref.dtype)


def tst_encoder_layer(src, params, *, n_heads, block_b=None):
    B, L, D = src.shape
    assert D % n_heads == 0
    d_k = D // n_heads

    if block_b is None:
        block_b = B
    assert B % block_b == 0, "batch must be divisible by the per-step batch block"

    bf16, f32 = jnp.bfloat16, jnp.float32

    # Fuse Q/K/V weights wrapper-side into one (D, 3D) matmul weight; matmul weights
    # are stored bf16 (f32 accumulation in-kernel); biases / LN params stay f32.
    wqkv = jnp.concatenate([params["wq"], params["wk"], params["wv"]], axis=1).astype(bf16)
    bqkv = jnp.concatenate([params["bq"], params["bk"], params["bv"]], axis=1).astype(f32)
    weights = [
        wqkv, bqkv,
        params["wo"].astype(bf16), params["bo"].astype(f32),
        params["g1"].astype(f32), params["be1"].astype(f32),
        params["w1"].astype(bf16), params["b1"].astype(f32),
        params["w2"].astype(bf16), params["b2"].astype(f32),
        params["g2"].astype(f32), params["be2"].astype(f32),
    ]

    x_spec = pl.BlockSpec((block_b, L, D), lambda b: (b, 0, 0))
    w_specs = [pl.BlockSpec(w.shape, lambda b: (0, 0)) for w in weights]

    kernel = functools.partial(tst_encoder_layer_kernel, n_heads=n_heads, d_k=d_k)

    return pl.pallas_call(
        kernel,
        out_shape=jax.ShapeDtypeStruct((B, L, D), src.dtype),
        grid_spec=pltpu.PrefetchScalarGridSpec(
            num_scalar_prefetch=0,
            grid=(B // block_b,),
            in_specs=[x_spec] + w_specs,
            out_specs=pl.BlockSpec((block_b, L, D), lambda b: (b, 0, 0)),
        ),
        compiler_params=pltpu.CompilerParams(
            # Batch blocks are independent -> shard across TensorCores (v7x megacore).
            dimension_semantics=("parallel",),
            # Explicit VMEM budget: weights (bf16, constant-indexed) + one activation
            # block fit comfortably; safe on v5e/v6e (128 MiB) and v7x (64 MiB).
            vmem_limit_bytes=64 * 1024 * 1024,
        ),
    )(src, *weights)


def _reference(src, params, n_heads):
    """Pure-JAX f32 reference of the same forward pass."""
    B, L, D = src.shape
    d_k = D // n_heads
    q = (src @ params["wq"] + params["bq"]).reshape(B, L, n_heads, d_k)
    k = (src @ params["wk"] + params["bk"]).reshape(B, L, n_heads, d_k)
    v = (src @ params["wv"] + params["bv"]).reshape(B, L, n_heads, d_k)
    s = jnp.einsum('blhd,bmhd->bhlm', q, k) / math.sqrt(d_k)
    p = jax.nn.softmax(s, axis=-1)
    attn = jnp.einsum('bhlm,bmhd->blhd', p, v).reshape(B, L, D)
    src2 = attn @ params["wo"] + params["bo"]
    x1 = _layer_norm(src + src2, params["g1"], params["be1"])
    h1 = _gelu_exact(x1 @ params["w1"] + params["b1"])
    ff = h1 @ params["w2"] + params["b2"]
    return _layer_norm(x1 + ff, params["g2"], params["be2"])


def init_params(key, d_model, d_ff):
    ks = jax.random.split(key, 8)
    s = 0.02
    f32 = jnp.float32
    return {
        "wq": jax.random.normal(ks[0], (d_model, d_model), f32) * s,
        "bq": jnp.zeros((1, d_model), f32),
        "wk": jax.random.normal(ks[1], (d_model, d_model), f32) * s,
        "bk": jnp.zeros((1, d_model), f32),
        "wv": jax.random.normal(ks[2], (d_model, d_model), f32) * s,
        "bv": jnp.zeros((1, d_model), f32),
        "wo": jax.random.normal(ks[3], (d_model, d_model), f32) * s,
        "bo": jnp.zeros((1, d_model), f32),
        "g1": jnp.ones((1, d_model), f32),
        "be1": jnp.zeros((1, d_model), f32),
        "w1": jax.random.normal(ks[4], (d_model, d_ff), f32) * s,
        "b1": jnp.zeros((1, d_ff), f32),
        "w2": jax.random.normal(ks[5], (d_ff, d_model), f32) * s,
        "b2": jnp.zeros((1, d_model), f32),
        "g2": jnp.ones((1, d_model), f32),
        "be2": jnp.zeros((1, d_model), f32),
    }


if __name__ == "__main__":
    # Small but lane-dense shapes: d_model=128 keeps the output last dim a full
    # 128-lane vreg (unmasked stores); d_ff=256 is the module default.
    B, L, D = 4, 16, 128        # batch, q_len, d_model
    n_heads, d_ff = 4, 256

    key = jax.random.PRNGKey(0)
    k_x, k_p = jax.random.split(key)
    src = jax.random.normal(k_x, (B, L, D), jnp.float32)
    params = init_params(k_p, D, d_ff)

    out = tst_encoder_layer(src, params, n_heads=n_heads, block_b=2)
    jax.block_until_ready(out)

    assert out.shape == (B, L, D)
    assert bool(jnp.all(jnp.isfinite(out)))

    ref = _reference(src, params, n_heads)
    err = float(jnp.max(jnp.abs(out - ref)))
    assert err < 5e-2, f"max abs error vs f32 reference too large: {err}"

    print("KERNEL_OK")
</pallas_src>

<mosaic_0001>
module attributes {stable_mosaic.version = 11 : i64} {
  func.func @tst_encoder_layer_kernel(%arg0: i32, %arg1: memref<2x16x128xf32, #tpu.memory_space<vmem>>, %arg2: memref<128x384xbf16, #tpu.memory_space<vmem>>, %arg3: memref<1x384xf32, #tpu.memory_space<vmem>>, %arg4: memref<128x128xbf16, #tpu.memory_space<vmem>>, %arg5: memref<1x128xf32, #tpu.memory_space<vmem>>, %arg6: memref<1x128xf32, #tpu.memory_space<vmem>>, %arg7: memref<1x128xf32, #tpu.memory_space<vmem>>, %arg8: memref<128x256xbf16, #tpu.memory_space<vmem>>, %arg9: memref<1x256xf32, #tpu.memory_space<vmem>>, %arg10: memref<256x128xbf16, #tpu.memory_space<vmem>>, %arg11: memref<1x128xf32, #tpu.memory_space<vmem>>, %arg12: memref<1x128xf32, #tpu.memory_space<vmem>>, %arg13: memref<1x128xf32, #tpu.memory_space<vmem>>, %arg14: memref<2x16x128xf32, #tpu.memory_space<vmem>>) attributes {dimension_semantics = [#tpu.dimension_semantics<parallel>], iteration_bounds = array<i64: 2>, scalar_prefetch = 0 : i64, scratch_operands = 0 : i64, tpu.core_type = #tpu.core_type<tc>, window_params = [{transform_indices = @transform_0, window_bounds = array<i64: 2, 16, 128>}, {pipeline_mode = #tpu.pipeline_mode<synchronous>, transform_indices = @transform_1, window_bounds = array<i64: 128, 384>}, {pipeline_mode = #tpu.pipeline_mode<synchronous>, transform_indices = @transform_2, window_bounds = array<i64: 1, 384>}, {pipeline_mode = #tpu.pipeline_mode<synchronous>, transform_indices = @transform_3, window_bounds = array<i64: 128, 128>}, {pipeline_mode = #tpu.pipeline_mode<synchronous>, transform_indices = @transform_4, window_bounds = array<i64: 1, 128>}, {pipeline_mode = #tpu.pipeline_mode<synchronous>, transform_indices = @transform_5, window_bounds = array<i64: 1, 128>}, {pipeline_mode = #tpu.pipeline_mode<synchronous>, transform_indices = @transform_6, window_bounds = array<i64: 1, 128>}, {pipeline_mode = #tpu.pipeline_mode<synchronous>, transform_indices = @transform_7, window_bounds = array<i64: 128, 256>}, {pipeline_mode = #tpu.pipeline_mode<synchronous>, transform_indices = @transform_8, window_bounds = array<i64: 1, 256>}, {pipeline_mode = #tpu.pipeline_mode<synchronous>, transform_indices = @transform_9, window_bounds = array<i64: 256, 128>}, {pipeline_mode = #tpu.pipeline_mode<synchronous>, transform_indices = @transform_10, window_bounds = array<i64: 1, 128>}, {pipeline_mode = #tpu.pipeline_mode<synchronous>, transform_indices = @transform_11, window_bounds = array<i64: 1, 128>}, {pipeline_mode = #tpu.pipeline_mode<synchronous>, transform_indices = @transform_12, window_bounds = array<i64: 1, 128>}, {transform_indices = @transform_13, window_bounds = array<i64: 2, 16, 128>}]} {
    %c0 = arith.constant 0 : index
    %c0_0 = arith.constant 0 : index
    %c0_1 = arith.constant 0 : index
    %0 = vector.load %arg1[%c0, %c0_0, %c0_1] : memref<2x16x128xf32, #tpu.memory_space<vmem>>, vector<2x16x128xf32>
    %1 = vector.shape_cast %0 : vector<2x16x128xf32> to vector<32x128xf32>
    %2 = arith.truncf %1 : vector<32x128xf32> to vector<32x128xbf16>
    %c0_2 = arith.constant 0 : index
    %c0_3 = arith.constant 0 : index
    %3 = vector.load %arg2[%c0_2, %c0_3] : memref<128x384xbf16, #tpu.memory_space<vmem>>, vector<128x384xbf16>
    %cst = arith.constant dense<0.000000e+00> : vector<32x384xf32>
    %4 = tpu.matmul %2, %3, %cst {dimension_numbers = #tpu.dot_dimension_numbers<[1], [0], [0], [1], [0, 0, 1, 1], [], []>} : vector<32x128xbf16>, vector<128x384xbf16>, vector<32x384xf32> -> vector<32x384xf32>
    %c0_4 = arith.constant 0 : index
    %c0_5 = arith.constant 0 : index
    %5 = vector.load %arg3[%c0_4, %c0_5] : memref<1x384xf32, #tpu.memory_space<vmem>>, vector<1x384xf32>
    %6 = vector.broadcast %5 : vector<1x384xf32> to vector<32x384xf32>
    %7 = arith.addf %4, %6 : vector<32x384xf32>
    %8 = vector.extract_strided_slice %7 {offsets = [0, 0], sizes = [32, 128], strides = [1, 1]} : vector<32x384xf32> to vector<32x128xf32>
    %cst_6 = arith.constant 0.176776692 : f32
    %9 = vector.broadcast %cst_6 : f32 to vector<32x128xf32>
    %10 = arith.mulf %8, %9 : vector<32x128xf32>
    %11 = vector.extract_strided_slice %7 {offsets = [0, 128], sizes = [32, 128], strides = [1, 1]} : vector<32x384xf32> to vector<32x128xf32>
    %12 = vector.extract_strided_slice %7 {offsets = [0, 256], sizes = [32, 128], strides = [1, 1]} : vector<32x384xf32> to vector<32x128xf32>
    %13 = arith.truncf %10 : vector<32x128xf32> to vector<32x128xbf16>
    %14 = vector.shape_cast %13 : vector<32x128xbf16> to vector<2x16x128xbf16>
    %15 = vector.extract_strided_slice %14 {offsets = [0, 0, 0], sizes = [2, 16, 32], strides = [1, 1, 1]} : vector<2x16x128xbf16> to vector<2x16x32xbf16>
    %16 = vector.extract_strided_slice %14 {offsets = [0, 0, 32], sizes = [2, 16, 32], strides = [1, 1, 1]} : vector<2x16x128xbf16> to vector<2x16x32xbf16>
    %17 = vector.extract_strided_slice %14 {offsets = [0, 0, 64], sizes = [2, 16, 32], strides = [1, 1, 1]} : vector<2x16x128xbf16> to vector<2x16x32xbf16>
    %18 = vector.extract_strided_slice %14 {offsets = [0, 0, 96], sizes = [2, 16, 32], strides = [1, 1, 1]} : vector<2x16x128xbf16> to vector<2x16x32xbf16>
    %19 = tpu.concatenate %15, %16, %17, %18 in 0 : vector<2x16x32xbf16>, vector<2x16x32xbf16>, vector<2x16x32xbf16>, vector<2x16x32xbf16> -> vector<8x16x32xbf16>
    %20 = arith.truncf %11 : vector<32x128xf32> to vector<32x128xbf16>
    %21 = vector.shape_cast %20 : vector<32x128xbf16> to vector<2x16x128xbf16>
    %22 = vector.extract_strided_slice %21 {offsets = [0, 0, 0], sizes = [2, 16, 32], strides = [1, 1, 1]} : vector<2x16x128xbf16> to vector<2x16x32xbf16>
    %23 = vector.extract_strided_slice %21 {offsets = [0, 0, 32], sizes = [2, 16, 32], strides = [1, 1, 1]} : vector<2x16x128xbf16> to vector<2x16x32xbf16>
    %24 = vector.extract_strided_slice %21 {offsets = [0, 0, 64], sizes = [2, 16, 32], strides = [1, 1, 1]} : vector<2x16x128xbf16> to vector<2x16x32xbf16>
    %25 = vector.extract_strided_slice %21 {offsets = [0, 0, 96], sizes = [2, 16, 32], strides = [1, 1, 1]} : vector<2x16x128xbf16> to vector<2x16x32xbf16>
    %26 = tpu.concatenate %22, %23, %24, %25 in 0 : vector<2x16x32xbf16>, vector<2x16x32xbf16>, vector<2x16x32xbf16>, vector<2x16x32xbf16> -> vector<8x16x32xbf16>
    %27 = arith.truncf %12 : vector<32x128xf32> to vector<32x128xbf16>
    %28 = vector.shape_cast %27 : vector<32x128xbf16> to vector<2x16x128xbf16>
    %29 = vector.extract_strided_slice %28 {offsets = [0, 0, 0], sizes = [2, 16, 32], strides = [1, 1, 1]} : vector<2x16x128xbf16> to vector<2x16x32xbf16>
    %30 = vector.extract_strided_slice %28 {offsets = [0, 0, 32], sizes = [2, 16, 32], strides = [1, 1, 1]} : vector<2x16x128xbf16> to vector<2x16x32xbf16>
    %31 = vector.extract_strided_slice %28 {offsets = [0, 0, 64], sizes = [2, 16, 32], strides = [1, 1, 1]} : vector<2x16x128xbf16> to vector<2x16x32xbf16>
    %32 = vector.extract_strided_slice %28 {offsets = [0, 0, 96], sizes = [2, 16, 32], strides = [1, 1, 1]} : vector<2x16x128xbf16> to vector<2x16x32xbf16>
    %33 = tpu.concatenate %29, %30, %31, %32 in 0 : vector<2x16x32xbf16>, vector<2x16x32xbf16>, vector<2x16x32xbf16>, vector<2x16x32xbf16> -> vector<8x16x32xbf16>
    "tpu.trace_start"() <{level = 10 : i32, message = "bld,bmd->blm"}> : () -> ()
    %cst_7 = arith.constant dense<0.000000e+00> : vector<8x16x16xf32>
    %34 = tpu.matmul %19, %26, %cst_7 {dimension_numbers = #tpu.dot_dimension_numbers<[2], [2], [1], [1], [0, 0, 0, 1, 1, 1], [0], [0]>} : vector<8x16x32xbf16>, vector<8x16x32xbf16>, vector<8x16x16xf32> -> vector<8x16x16xf32>
    "tpu.trace_stop"() : () -> ()
    %cst_8 = arith.constant dense<0xFF800000> : vector<8x16xf32>
    %35 = vector.multi_reduction <maximumf>, %34, %cst_8 [2] : vector<8x16x16xf32> to vector<8x16xf32>
    %36 = vector.shape_cast %35 : vector<8x16xf32> to vector<8x16x1xf32>
    %37 = vector.broadcast %36 : vector<8x16x1xf32> to vector<8x16x16xf32>
    %38 = arith.subf %34, %37 : vector<8x16x16xf32>
    %39 = math.exp %38 : vector<8x16x16xf32>
    %cst_9 = arith.constant dense<0.000000e+00> : vector<8x16xf32>
    %40 = vector.multi_reduction <add>, %39, %cst_9 [2] : vector<8x16x16xf32> to vector<8x16xf32>
    %41 = vector.shape_cast %40 : vector<8x16xf32> to vector<8x16x1xf32>
    %42 = tpu.reciprocal %41 {approx = true} : vector<8x16x1xf32> -> vector<8x16x1xf32>
    %43 = vector.broadcast %42 : vector<8x16x1xf32> to vector<8x16x16xf32>
    %44 = arith.mulf %39, %43 : vector<8x16x16xf32>
    %45 = arith.truncf %44 : vector<8x16x16xf32> to vector<8x16x16xbf16>
    "tpu.trace_start"() <{level = 10 : i32, message = "blm,bmd->bld"}> : () -> ()
    %cst_10 = arith.constant dense<0.000000e+00> : vector<8x16x32xf32>
    %46 = tpu.matmul %45, %33, %cst_10 {dimension_numbers = #tpu.dot_dimension_numbers<[2], [1], [1], [2], [0, 0, 0, 1, 1, 2], [0], [0]>} : vector<8x16x16xbf16>, vector<8x16x32xbf16>, vector<8x16x32xf32> -> vector<8x16x32xf32>
    "tpu.trace_stop"() : () -> ()
    %47 = vector.extract_strided_slice %46 {offsets = [0, 0, 0], sizes = [2, 16, 32], strides = [1, 1, 1]} : vector<8x16x32xf32> to vector<2x16x32xf32>
    %48 = vector.extract_strided_slice %46 {offsets = [2, 0, 0], sizes = [2, 16, 32], strides = [1, 1, 1]} : vector<8x16x32xf32> to vector<2x16x32xf32>
    %49 = vector.extract_strided_slice %46 {offsets = [4, 0, 0], sizes = [2, 16, 32], strides = [1, 1, 1]} : vector<8x16x32xf32> to vector<2x16x32xf32>
    %50 = vector.extract_strided_slice %46 {offsets = [6, 0, 0], sizes = [2, 16, 32], strides = [1, 1, 1]} : vector<8x16x32xf32> to vector<2x16x32xf32>
    %51 = tpu.concatenate %47, %48, %49, %50 in 2 : vector<2x16x32xf32>, vector<2x16x32xf32>, vector<2x16x32xf32>, vector<2x16x32xf32> -> vector<2x16x128xf32>
    %52 = vector.shape_cast %51 : vector<2x16x128xf32> to vector<32x128xf32>
    %53 = arith.truncf %52 : vector<32x128xf32> to vector<32x128xbf16>
    %c0_11 = arith.constant 0 : index
    %c0_12 = arith.constant 0 : index
    %54 = vector.load %arg4[%c0_11, %c0_12] : memref<128x128xbf16, #tpu.memory_space<vmem>>, vector<128x128xbf16>
    %cst_13 = arith.constant dense<0.000000e+00> : vector<32x128xf32>
    %55 = tpu.matmul %53, %54, %cst_13 {dimension_numbers = #tpu.dot_dimension_numbers<[1], [0], [0], [1], [0, 0, 1, 1], [], []>} : vector<32x128xbf16>, vector<128x128xbf16>, vector<32x128xf32> -> vector<32x128xf32>
    %c0_14 = arith.constant 0 : index
    %c0_15 = arith.constant 0 : index
    %56 = vector.load %arg5[%c0_14, %c0_15] : memref<1x128xf32, #tpu.memory_space<vmem>>, vector<1x128xf32>
    %57 = vector.broadcast %56 : vector<1x128xf32> to vector<32x128xf32>
    %58 = arith.addf %55, %57 : vector<32x128xf32>
    %59 = arith.addf %1, %58 : vector<32x128xf32>
    %c0_16 = arith.constant 0 : index
    %c0_17 = arith.constant 0 : index
    %60 = vector.load %arg6[%c0_16, %c0_17] : memref<1x128xf32, #tpu.memory_space<vmem>>, vector<1x128xf32>
    %c0_18 = arith.constant 0 : index
    %c0_19 = arith.constant 0 : index
    %61 = vector.load %arg7[%c0_18, %c0_19] : memref<1x128xf32, #tpu.memory_space<vmem>>, vector<1x128xf32>
    %cst_20 = arith.constant dense<0.000000e+00> : vector<32xf32>
    %62 = vector.multi_reduction <add>, %59, %cst_20 [1] : vector<32x128xf32> to vector<32xf32>
    %63 = vector.shape_cast %62 : vector<32xf32> to vector<32x1xf32>
    %cst_21 = arith.constant 1.280000e+02 : f32
    %64 = vector.broadcast %cst_21 : f32 to vector<32x1xf32>
    %65 = arith.divf %63, %64 : vector<32x1xf32>
    %66 = vector.broadcast %65 : vector<32x1xf32> to vector<32x128xf32>
    %67 = arith.subf %59, %66 : vector<32x128xf32>
    %68 = arith.mulf %67, %67 : vector<32x128xf32>
    %cst_22 = arith.constant dense<0.000000e+00> : vector<32xf32>
    %69 = vector.multi_reduction <add>, %68, %cst_22 [1] : vector<32x128xf32> to vector<32xf32>
    %70 = vector.shape_cast %69 : vector<32xf32> to vector<32x1xf32>
    %cst_23 = arith.constant 1.280000e+02 : f32
    %71 = vector.broadcast %cst_23 : f32 to vector<32x1xf32>
    %72 = arith.divf %70, %71 : vector<32x1xf32>
    %73 = vector.broadcast %65 : vector<32x1xf32> to vector<32x128xf32>
    %74 = arith.subf %59, %73 : vector<32x128xf32>
    %cst_24 = arith.constant 9.99999974E-6 : f32
    %75 = vector.broadcast %cst_24 : f32 to vector<32x1xf32>
    %76 = arith.addf %72, %75 : vector<32x1xf32>
    %77 = math.rsqrt %76 : vector<32x1xf32>
    %78 = vector.broadcast %77 : vector<32x1xf32> to vector<32x128xf32>
    %79 = arith.mulf %74, %78 : vector<32x128xf32>
    %80 = vector.broadcast %60 : vector<1x128xf32> to vector<32x128xf32>
    %81 = arith.mulf %79, %80 : vector<32x128xf32>
    %82 = vector.broadcast %61 : vector<1x128xf32> to vector<32x128xf32>
    %83 = arith.addf %81, %82 : vector<32x128xf32>
    %84 = arith.truncf %83 : vector<32x128xf32> to vector<32x128xbf16>
    %c0_25 = arith.constant 0 : index
    %c0_26 = arith.constant 0 : index
    %85 = vector.load %arg8[%c0_25, %c0_26] : memref<128x256xbf16, #tpu.memory_space<vmem>>, vector<128x256xbf16>
    %cst_27 = arith.constant dense<0.000000e+00> : vector<32x256xf32>
    %86 = tpu.matmul %84, %85, %cst_27 {dimension_numbers = #tpu.dot_dimension_numbers<[1], [0], [0], [1], [0, 0, 1, 1], [], []>} : vector<32x128xbf16>, vector<128x256xbf16>, vector<32x256xf32> -> vector<32x256xf32>
    %c0_28 = arith.constant 0 : index
    %c0_29 = arith.constant 0 : index
    %87 = vector.load %arg9[%c0_28, %c0_29] : memref<1x256xf32, #tpu.memory_space<vmem>>, vector<1x256xf32>
    %88 = vector.broadcast %87 : vector<1x256xf32> to vector<32x256xf32>
    %89 = arith.addf %86, %88 : vector<32x256xf32>
    %cst_30 = arith.constant 5.000000e-01 : f32
    %90 = vector.broadcast %cst_30 : f32 to vector<32x256xf32>
    %91 = arith.mulf %90, %89 : vector<32x256xf32>
    %cst_31 = arith.constant 0.707106769 : f32
    %92 = vector.broadcast %cst_31 : f32 to vector<32x256xf32>
    %93 = arith.mulf %89, %92 : vector<32x256xf32>
    %94 = math.erf %93 : vector<32x256xf32>
    %cst_32 = arith.constant 1.000000e+00 : f32
    %95 = vector.broadcast %cst_32 : f32 to vector<32x256xf32>
    %96 = arith.addf %95, %94 : vector<32x256xf32>
    %97 = arith.mulf %91, %96 : vector<32x256xf32>
    %98 = arith.truncf %97 : vector<32x256xf32> to vector<32x256xbf16>
    %c0_33 = arith.constant 0 : index
    %c0_34 = arith.constant 0 : index
    %99 = vector.load %arg10[%c0_33, %c0_34] : memref<256x128xbf16, #tpu.memory_space<vmem>>, vector<256x128xbf16>
    %cst_35 = arith.constant dense<0.000000e+00> : vector<32x128xf32>
    %100 = tpu.matmul %98, %99, %cst_35 {dimension_numbers = #tpu.dot_dimension_numbers<[1], [0], [0], [1], [0, 0, 1, 1], [], []>} : vector<32x256xbf16>, vector<256x128xbf16>, vector<32x128xf32> -> vector<32x128xf32>
    %c0_36 = arith.constant 0 : index
    %c0_37 = arith.constant 0 : index
    %101 = vector.load %arg11[%c0_36, %c0_37] : memref<1x128xf32, #tpu.memory_space<vmem>>, vector<1x128xf32>
    %102 = vector.broadcast %101 : vector<1x128xf32> to vector<32x128xf32>
    %103 = arith.addf %100, %102 : vector<32x128xf32>
    %104 = arith.addf %83, %103 : vector<32x128xf32>
    %c0_38 = arith.constant 0 : index
    %c0_39 = arith.constant 0 : index
    %105 = vector.load %arg12[%c0_38, %c0_39] : memref<1x128xf32, #tpu.memory_space<vmem>>, vector<1x128xf32>
    %c0_40 = arith.constant 0 : index
    %c0_41 = arith.constant 0 : index
    %106 = vector.load %arg13[%c0_40, %c0_41] : memref<1x128xf32, #tpu.memory_space<vmem>>, vector<1x128xf32>
    %cst_42 = arith.constant dense<0.000000e+00> : vector<32xf32>
    %107 = vector.multi_reduction <add>, %104, %cst_42 [1] : vector<32x128xf32> to vector<32xf32>
    %108 = vector.shape_cast %107 : vector<32xf32> to vector<32x1xf32>
    %cst_43 = arith.constant 1.280000e+02 : f32
    %109 = vector.broadcast %cst_43 : f32 to vector<32x1xf32>
    %110 = arith.divf %108, %109 : vector<32x1xf32>
    %111 = vector.broadcast %110 : vector<32x1xf32> to vector<32x128xf32>
    %112 = arith.subf %104, %111 : vector<32x128xf32>
    %113 = arith.mulf %112, %112 : vector<32x128xf32>
    %cst_44 = arith.constant dense<0.000000e+00> : vector<32xf32>
    %114 = vector.multi_reduction <add>, %113, %cst_44 [1] : vector<32x128xf32> to vector<32xf32>
    %115 = vector.shape_cast %114 : vector<32xf32> to vector<32x1xf32>
    %cst_45 = arith.constant 1.280000e+02 : f32
    %116 = vector.broadcast %cst_45 : f32 to vector<32x1xf32>
    %117 = arith.divf %115, %116 : vector<32x1xf32>
    %118 = vector.broadcast %110 : vector<32x1xf32> to vector<32x128xf32>
    %119 = arith.subf %104, %118 : vector<32x128xf32>
    %cst_46 = arith.constant 9.99999974E-6 : f32
    %120 = vector.broadcast %cst_46 : f32 to vector<32x1xf32>
    %121 = arith.addf %117, %120 : vector<32x1xf32>
    %122 = math.rsqrt %121 : vector<32x1xf32>
    %123 = vector.broadcast %122 : vector<32x1xf32> to vector<32x128xf32>
    %124 = arith.mulf %119, %123 : vector<32x128xf32>
    %125 = vector.broadcast %105 : vector<1x128xf32> to vector<32x128xf32>
    %126 = arith.mulf %124, %125 : vector<32x128xf32>
    %127 = vector.broadcast %106 : vector<1x128xf32> to vector<32x128xf32>
    %128 = arith.addf %126, %127 : vector<32x128xf32>
    %129 = vector.shape_cast %128 : vector<32x128xf32> to vector<2x16x128xf32>
    %c0_47 = arith.constant 0 : index
    %c0_48 = arith.constant 0 : index
    %c0_49 = arith.constant 0 : index
    %130 = vector.load %arg14[%c0_47, %c0_48, %c0_49] : memref<2x16x128xf32, #tpu.memory_space<vmem>>, vector<2x16x128xf32>
    tpu.vector_store %arg14[%c0_47, %c0_48, %c0_49], %129 {strides = array<i32>} : memref<2x16x128xf32, #tpu.memory_space<vmem>>, vector<2x16x128xf32>,
    return
  }
  func.func @transform_0(%arg0: i32) -> (i32, i32, i32) {
    %c0_i32 = arith.constant 0 : i32
    %c0_i32_0 = arith.constant 0 : i32
    %c0_i32_1 = arith.constant 0 : i32
    return %arg0, %c0_i32, %c0_i32_0 : i32, i32, i32
  }
  func.func @transform_1(%arg0: i32) -> (i32, i32) {
    %c0_i32 = arith.constant 0 : i32
    %c0_i32_0 = arith.constant 0 : i32
    %c0_i32_1 = arith.constant 0 : i32
    return %c0_i32, %c0_i32_0 : i32, i32
  }
  func.func @transform_2(%arg0: i32) -> (i32, i32) {
    %c0_i32 = arith.constant 0 : i32
    %c0_i32_0 = arith.constant 0 : i32
    %c0_i32_1 = arith.constant 0 : i32
    return %c0_i32, %c0_i32_0 : i32, i32
  }
  func.func @transform_3(%arg0: i32) -> (i32, i32) {
    %c0_i32 = arith.constant 0 : i32
    %c0_i32_0 = arith.constant 0 : i32
    %c0_i32_1 = arith.constant 0 : i32
    return %c0_i32, %c0_i32_0 : i32, i32
  }
  func.func @transform_4(%arg0: i32) -> (i32, i32) {
    %c0_i32 = arith.constant 0 : i32
    %c0_i32_0 = arith.constant 0 : i32
    %c0_i32_1 = arith.constant 0 : i32
    return %c0_i32, %c0_i32_0 : i32, i32
  }
  func.func @transform_5(%arg0: i32) -> (i32, i32) {
    %c0_i32 = arith.constant 0 : i32
    %c0_i32_0 = arith.constant 0 : i32
    %c0_i32_1 = arith.constant 0 : i32
    return %c0_i32, %c0_i32_0 : i32, i32
  }
  func.func @transform_6(%arg0: i32) -> (i32, i32) {
    %c0_i32 = arith.constant 0 : i32
    %c0_i32_0 = arith.constant 0 : i32
    %c0_i32_1 = arith.constant 0 : i32
    return %c0_i32, %c0_i32_0 : i32, i32
  }
  func.func @transform_7(%arg0: i32) -> (i32, i32) {
    %c0_i32 = arith.constant 0 : i32
    %c0_i32_0 = arith.constant 0 : i32
    %c0_i32_1 = arith.constant 0 : i32
    return %c0_i32, %c0_i32_0 : i32, i32
  }
  func.func @transform_8(%arg0: i32) -> (i32, i32) {
    %c0_i32 = arith.constant 0 : i32
    %c0_i32_0 = arith.constant 0 : i32
    %c0_i32_1 = arith.constant 0 : i32
    return %c0_i32, %c0_i32_0 : i32, i32
  }
  func.func @transform_9(%arg0: i32) -> (i32, i32) {
    %c0_i32 = arith.constant 0 : i32
    %c0_i32_0 = arith.constant 0 : i32
    %c0_i32_1 = arith.constant 0 : i32
    return %c0_i32, %c0_i32_0 : i32, i32
  }
  func.func @transform_10(%arg0: i32) -> (i32, i32) {
    %c0_i32 = arith.constant 0 : i32
    %c0_i32_0 = arith.constant 0 : i32
    %c0_i32_1 = arith.constant 0 : i32
    return %c0_i32, %c0_i32_0 : i32, i32
  }
  func.func @transform_11(%arg0: i32) -> (i32, i32) {
    %c0_i32 = arith.constant 0 : i32
    %c0_i32_0 = arith.constant 0 : i32
    %c0_i32_1 = arith.constant 0 : i32
    return %c0_i32, %c0_i32_0 : i32, i32
  }
  func.func @transform_12(%arg0: i32) -> (i32, i32) {
    %c0_i32 = arith.constant 0 : i32
    %c0_i32_0 = arith.constant 0 : i32
    %c0_i32_1 = arith.constant 0 : i32
    return %c0_i32, %c0_i32_0 : i32, i32
  }
  func.func @transform_13(%arg0: i32) -> (i32, i32, i32) {
    %c0_i32 = arith.constant 0 : i32
    %c0_i32_0 = arith.constant 0 : i32
    %c0_i32_1 = arith.constant 0 : i32
    return %arg0, %c0_i32, %c0_i32_0 : i32, i32, i32
  }
}

</mosaic_0001>

<llo_original>
// kernel: tpu_custom_call.1
$region0: #{tpu_custom_call.1}
  #allocation0 [shape = 'u32[]', space=smem, size = 0x4, offset = 0x4, fixed_abs, tag = 'smem constant byte address 0x4 - core index']
  #allocation1 [shape = 'u32[144,128]{1,0:T(1,128)}', space=vmem, size = 0x12000, scoped, tag = 'internal scratch']
  %s0 = inlined_call_operand.hbm [shape: f32[4,16,128], index: 0, kind: input, shape index: {}]
  %s1 = inlined_call_operand.hbm [shape: bf16[128,384], index: 1, kind: input, shape index: {}]
  %s2 = inlined_call_operand.hbm [shape: f32[1,384], index: 2, kind: input, shape index: {}]
  %s3 = inlined_call_operand.hbm [shape: bf16[128,128], index: 3, kind: input, shape index: {}]
  %s4 = inlined_call_operand.hbm [shape: f32[1,128], index: 4, kind: input, shape index: {}]
  %s5 = inlined_call_operand.hbm [shape: f32[1,128], index: 5, kind: input, shape index: {}]
  %s6 = inlined_call_operand.hbm [shape: f32[1,128], index: 6, kind: input, shape index: {}]
  %s7 = inlined_call_operand.hbm [shape: bf16[128,256], index: 7, kind: input, shape index: {}]
  %s8 = inlined_call_operand.hbm [shape: f32[1,256], index: 8, kind: input, shape index: {}]
  %s9 = inlined_call_operand.hbm [shape: bf16[256,128], index: 9, kind: input, shape index: {}]
  %s10 = inlined_call_operand.hbm [shape: f32[1,128], index: 10, kind: input, shape index: {}]
  %s11 = inlined_call_operand.hbm [shape: f32[1,128], index: 11, kind: input, shape index: {}]
  %s12 = inlined_call_operand.hbm [shape: f32[1,128], index: 12, kind: input, shape index: {}]
  %s13 = inlined_call_operand.hbm [shape: f32[4,16,128], index: 13, kind: output, shape index: {}]
  %s14 = sld [smem:[#allocation0]]
  $region137: #{tpu_custom_call.1} parent=0
    _
  %s16 = ssub.s32 1, %s14
  %s17 = scalar_select 0, %s16, %s14
  $region1: #{tpu_custom_call.1} parent=0
    #allocation2 [shape = 'u8[32768]{0}', space=vmem, size = 0x8000, scoped, tag = 'input window, operand 0']
    #allocation3 [shape = 's32[2]{0}', space=sflag, size = 0x8, scoped, tag = 'scoped memory for tpu_custom_call.1']
    #allocation4 [shape = 's32[2]{0}', space=sflag, size = 0x8, scoped, tag = 'scoped memory for tpu_custom_call.1']
    #allocation5 [shape = 'u8[98304]{0}', space=vmem, size = 0x18000, scoped, tag = 'input window, operand 1, single buffered']
    #allocation6 [shape = 's32[1]{0}', space=sflag, size = 0x4, scoped, tag = 'scoped memory for tpu_custom_call.1']
    #allocation7 [shape = 'u8[1536]{0}', space=vmem, size = 0x800, scoped, tag = 'input window, operand 2, single buffered']
    #allocation8 [shape = 'u8[32768]{0}', space=vmem, size = 0x8000, scoped, tag = 'input window, operand 3, single buffered']
    #allocation9 [shape = 's32[1]{0}', space=sflag, size = 0x4, scoped, tag = 'scoped memory for tpu_custom_call.1']
    #allocation10 [shape = 'u8[512]{0}', space=vmem, size = 0x400, scoped, tag = 'input window, operand 4, single buffered']
    #allocation11 [shape = 'u8[512]{0}', space=vmem, size = 0x400, scoped, tag = 'input window, operand 5, single buffered']
    #allocation12 [shape = 's32[1]{0}', space=sflag, size = 0x4, scoped, tag = 'scoped memory for tpu_custom_call.1']
    #allocation13 [shape = 'u8[512]{0}', space=vmem, size = 0x400, scoped, tag = 'input window, operand 6, single buffered']
    #allocation14 [shape = 'u8[65536]{0}', space=vmem, size = 0x10000, scoped, tag = 'input window, operand 7, single buffered']
    #allocation15 [shape = 's32[1]{0}', space=sflag, size = 0x4, scoped, tag = 'scoped memory for tpu_custom_call.1']
    #allocation16 [shape = 'u8[1024]{0}', space=vmem, size = 0x400, scoped, tag = 'input window, operand 8, single buffered']
    #allocation17 [shape = 'u8[65536]{0}', space=vmem, size = 0x10000, scoped, tag = 'input window, operand 9, single buffered']
    #allocation18 [shape = 's32[1]{0}', space=sflag, size = 0x4, scoped, tag = 'scoped memory for tpu_custom_call.1']
    #allocation19 [shape = 'u8[512]{0}', space=vmem, size = 0x400, scoped, tag = 'input window, operand 10, single buffered']
    #allocation20 [shape = 'u8[512]{0}', space=vmem, size = 0x400, scoped, tag = 'input window, operand 11, single buffered']
    #allocation21 [shape = 's32[1]{0}', space=sflag, size = 0x4, scoped, tag = 'scoped memory for tpu_custom_call.1']
    #allocation22 [shape = 'u8[512]{0}', space=vmem, size = 0x400, scoped, tag = 'input window, operand 12, single buffered']
    #allocation23 [shape = 'u8[32768]{0}', space=vmem, size = 0x8000, scoped, tag = 'output window, operand 0']
    %18 = vsyncpa [#allocation3], 0
    %s19 = scalar_lea.sflag [#allocation3], 1
    %20 = vsyncpa %s19, 0
    %21 = vsyncpa [#allocation6], 0
    %22 = vsyncpa [#allocation9], 0
    %23 = vsyncpa [#allocation12], 0
    %24 = vsyncpa [#allocation15], 0
    %25 = vsyncpa [#allocation18], 0
    %26 = vsyncpa [#allocation21], 0
    %27 = vsyncpa [#allocation4], 0
    %s28 = scalar_lea.sflag [#allocation4], 1
    %29 = vsyncpa %s28, 0
    loop: start=0, step=1, limit=4
    $region2: #{tpu_custom_call.1} parent=1 // loop_pre_header
      _
    $region3: #{tpu_custom_call.1} parent=1 // loop_header
      %s31 = sphi 0, %s35
      %p32 = scmp.ge.s32.totalorder %s31, 4
      %s41 = sphi 0, %s43
      %s44 = sphi 0, %s41
      %s45 = sphi 0, %s44
      %s61 = sphi 0, %s45
      %s65 = sphi 0, %s65
      %s67 = sphi 0, %s65
      %s68 = sphi 0, %s67
      %s82 = sphi 0, %s68
      %s86 = sphi 0, %s86
      %s88 = sphi 0, %s86
      %s89 = sphi 0, %s88
      %s103 = sphi 0, %s89
      %s107 = sphi 0, %s107
      %s109 = sphi 0, %s107
      %s110 = sphi 0, %s109
      %s124 = sphi 0, %s110
      %s128 = sphi 0, %s128
      %s130 = sphi 0, %s128
      %s131 = sphi 0, %s130
      %s145 = sphi 0, %s131
      %s149 = sphi 0, %s149
      %s151 = sphi 0, %s149
      %s152 = sphi 0, %s151
      %s166 = sphi 0, %s152
      %s170 = sphi 0, %s170
      %s172 = sphi 0, %s170
      %s173 = sphi 0, %s172
      %s187 = sphi 0, %s173
      %s191 = sphi 0, %s191
      %s193 = sphi 0, %s191
      %s194 = sphi 0, %s193
      %s208 = sphi 0, %s194
      %s212 = sphi 0, %s212
      %s214 = sphi 0, %s212
      %s215 = sphi 0, %s214
      %s229 = sphi 0, %s215
      %s233 = sphi 0, %s233
      %s235 = sphi 0, %s233
      %s236 = sphi 0, %s235
      %s250 = sphi 0, %s236
      %s254 = sphi 0, %s254
      %s256 = sphi 0, %s254
      %s257 = sphi 0, %s256
      %s271 = sphi 0, %s257
      %s275 = sphi 0, %s275
      %s277 = sphi 0, %s275
      %s278 = sphi 0, %s277
      %s292 = sphi 0, %s278
      %s296 = sphi 0, %s296
      %s298 = sphi 0, %s296
      %s299 = sphi 0, %s298
      %s313 = sphi 0, %s299
      %s319 = sphi 0, %s321
      %s322 = sphi 0, %s319
      %s323 = sphi 0, %s322
      %s339 = sphi 0, %s323
    $region4: #{tpu_custom_call.1} parent=1 // loop_header_branch
      %34 = sbr.rel (%p32) target = $region8
    $region5: #{tpu_custom_call.1} parent=1 // loop_body
      %s36 = ssub.s32 %s31, 1
      %s37 = ssub.s32 %s31, 2
      %s38 = sadd.s32 %s31, 1
      %s39 = ssub.s32 %s31, %s38
      %p40 = scmp.eq.s32.totalorder %s39, 0
      %s42 = sadd.s32 %s41, 1
      %s43 = scalar_select %p40, %s41, %s42
      %p46 = pneg %p40
      %p47 = scmp.eq.s32.totalorder %s31, 1
      %p48 = por %p46, %p47
      %p49 = scmp.ne.s32.totalorder %s41, %s44
      %p50 = scmp.eq.s32.totalorder %s31, 0
      %p51 = por %p49, %p50
      %p52 = scmp.ne.s32.totalorder %s41, %s44
      %p53 = scmp.eq.s32.totalorder %s36, 1
      %p54 = por %p52, %p53
      %p55 = scmp.ne.s32.totalorder %s44, %s45
      %p56 = scmp.eq.s32.totalorder %s36, 0
      %p57 = por %p55, %p56
      %p58 = scmp.ne.s32.totalorder %s44, %s45
      %p59 = scmp.eq.s32.totalorder %s37, 1
      %p60 = por %p58, %p59
      %p62 = scmp.ne.s32.totalorder %s45, %s61
      %p63 = scmp.eq.s32.totalorder %s37, 0
      %p64 = por %p62, %p63
      %s66 = sadd.s32 %s65, 1
      %p69 = scmp.eq.s32.totalorder %s31, 1
      %p70 = scmp.ne.s32.totalorder %s65, %s67
      %p71 = scmp.eq.s32.totalorder %s31, 0
      %p72 = por %p70, %p71
      %p73 = scmp.ne.s32.totalorder %s65, %s67
      %p74 = scmp.eq.s32.totalorder %s36, 1
      %p75 = por %p73, %p74
      %p76 = scmp.ne.s32.totalorder %s67, %s68
      %p77 = scmp.eq.s32.totalorder %s36, 0
      %p78 = por %p76, %p77
      %p79 = scmp.ne.s32.totalorder %s67, %s68
      %p80 = scmp.eq.s32.totalorder %s37, 1
      %p81 = por %p79, %p80
      %p83 = scmp.ne.s32.totalorder %s68, %s82
      %p84 = scmp.eq.s32.totalorder %s37, 0
      %p85 = por %p83, %p84
      %s87 = sadd.s32 %s86, 1
      %p90 = scmp.eq.s32.totalorder %s31, 1
      %p91 = scmp.ne.s32.totalorder %s86, %s88
      %p92 = scmp.eq.s32.totalorder %s31, 0
      %p93 = por %p91, %p92
      %p94 = scmp.ne.s32.totalorder %s86, %s88
      %p95 = scmp.eq.s32.totalorder %s36, 1
      %p96 = por %p94, %p95
      %p97 = scmp.ne.s32.totalorder %s88, %s89
      %p98 = scmp.eq.s32.totalorder %s36, 0
      %p99 = por %p97, %p98
      %p100 = scmp.ne.s32.totalorder %s88, %s89
      %p101 = scmp.eq.s32.totalorder %s37, 1
      %p102 = por %p100, %p101
      %p104 = scmp.ne.s32.totalorder %s89, %s103
      %p105 = scmp.eq.s32.totalorder %s37, 0
      %p106 = por %p104, %p105
      %s108 = sadd.s32 %s107, 1
      %p111 = scmp.eq.s32.totalorder %s31, 1
      %p112 = scmp.ne.s32.totalorder %s107, %s109
      %p113 = scmp.eq.s32.totalorder %s31, 0
      %p114 = por %p112, %p113
      %p115 = scmp.ne.s32.totalorder %s107, %s109
      %p116 = scmp.eq.s32.totalorder %s36, 1
      %p117 = por %p115, %p116
      %p118 = scmp.ne.s32.totalorder %s109, %s110
      %p119 = scmp.eq.s32.totalorder %s36, 0
      %p120 = por %p118, %p119
      %p121 = scmp.ne.s32.totalorder %s109, %s110
      %p122 = scmp.eq.s32.totalorder %s37, 1
      %p123 = por %p121, %p122
      %p125 = scmp.ne.s32.totalorder %s110, %s124
      %p126 = scmp.eq.s32.totalorder %s37, 0
      %p127 = por %p125, %p126
      %s129 = sadd.s32 %s128, 1
      %p132 = scmp.eq.s32.totalorder %s31, 1
      %p133 = scmp.ne.s32.totalorder %s128, %s130
      %p134 = scmp.eq.s32.totalorder %s31, 0
      %p135 = por %p133, %p134
      %p136 = scmp.ne.s32.totalorder %s128, %s130
      %p137 = scmp.eq.s32.totalorder %s36, 1
      %p138 = por %p136, %p137
      %p139 = scmp.ne.s32.totalorder %s130, %s131
      %p140 = scmp.eq.s32.totalorder %s36, 0
      %p141 = por %p139, %p140
      %p142 = scmp.ne.s32.totalorder %s130, %s131
      %p143 = scmp.eq.s32.totalorder %s37, 1
      %p144 = por %p142, %p143
      %p146 = scmp.ne.s32.totalorder %s131, %s145
      %p147 = scmp.eq.s32.totalorder %s37, 0
      %p148 = por %p146, %p147
      %s150 = sadd.s32 %s149, 1
      %p153 = scmp.eq.s32.totalorder %s31, 1
      %p154 = scmp.ne.s32.totalorder %s149, %s151
      %p155 = scmp.eq.s32.totalorder %s31, 0
      %p156 = por %p154, %p155
      %p157 = scmp.ne.s32.totalorder %s149, %s151
      %p158 = scmp.eq.s32.totalorder %s36, 1
      %p159 = por %p157, %p158
      %p160 = scmp.ne.s32.totalorder %s151, %s152
      %p161 = scmp.eq.s32.totalorder %s36, 0
      %p162 = por %p160, %p161
      %p163 = scmp.ne.s32.totalorder %s151, %s152
      %p164 = scmp.eq.s32.totalorder %s37, 1
      %p165 = por %p163, %p164
      %p167 = scmp.ne.s32.totalorder %s152, %s166
      %p168 = scmp.eq.s32.totalorder %s37, 0
      %p169 = por %p167, %p168
      %s171 = sadd.s32 %s170, 1
      %p174 = scmp.eq.s32.totalorder %s31, 1
      %p175 = scmp.ne.s32.totalorder %s170, %s172
      %p176 = scmp.eq.s32.totalorder %s31, 0
      %p177 = por %p175, %p176
      %p178 = scmp.ne.s32.totalorder %s170, %s172
      %p179 = scmp.eq.s32.totalorder %s36, 1
      %p180 = por %p178, %p179
      %p181 = scmp.ne.s32.totalorder %s172, %s173
      %p182 = scmp.eq.s32.totalorder %s36, 0
      %p183 = por %p181, %p182
      %p184 = scmp.ne.s32.totalorder %s172, %s173
      %p185 = scmp.eq.s32.totalorder %s37, 1
      %p186 = por %p184, %p185
      %p188 = scmp.ne.s32.totalorder %s173, %s187
      %p189 = scmp.eq.s32.totalorder %s37, 0
      %p190 = por %p188, %p189
      %s192 = sadd.s32 %s191, 1
      %p195 = scmp.eq.s32.totalorder %s31, 1
      %p196 = scmp.ne.s32.totalorder %s191, %s193
      %p197 = scmp.eq.s32.totalorder %s31, 0
      %p198 = por %p196, %p197
      %p199 = scmp.ne.s32.totalorder %s191, %s193
      %p200 = scmp.eq.s32.totalorder %s36, 1
      %p201 = por %p199, %p200
      %p202 = scmp.ne.s32.totalorder %s193, %s194
      %p203 = scmp.eq.s32.totalorder %s36, 0
      %p204 = por %p202, %p203
      %p205 = scmp.ne.s32.totalorder %s193, %s194
      %p206 = scmp.eq.s32.totalorder %s37, 1
      %p207 = por %p205, %p206
      %p209 = scmp.ne.s32.totalorder %s194, %s208
      %p210 = scmp.eq.s32.totalorder %s37, 0
      %p211 = por %p209, %p210
      %s213 = sadd.s32 %s212, 1
      %p216 = scmp.eq.s32.totalorder %s31, 1
      %p217 = scmp.ne.s32.totalorder %s212, %s214
      %p218 = scmp.eq.s32.totalorder %s31, 0
      %p219 = por %p217, %p218
      %p220 = scmp.ne.s32.totalorder %s212, %s214
      %p221 = scmp.eq.s32.totalorder %s36, 1
      %p222 = por %p220, %p221
      %p223 = scmp.ne.s32.totalorder %s214, %s215
      %p224 = scmp.eq.s32.totalorder %s36, 0
      %p225 = por %p223, %p224
      %p226 = scmp.ne.s32.totalorder %s214, %s215
      %p227 = scmp.eq.s32.totalorder %s37, 1
      %p228 = por %p226, %p227
      %p230 = scmp.ne.s32.totalorder %s215, %s229
      %p231 = scmp.eq.s32.totalorder %s37, 0
      %p232 = por %p230, %p231
      %s234 = sadd.s32 %s233, 1
      %p237 = scmp.eq.s32.totalorder %s31, 1
      %p238 = scmp.ne.s32.totalorder %s233, %s235
      %p239 = scmp.eq.s32.totalorder %s31, 0
      %p240 = por %p238, %p239
      %p241 = scmp.ne.s32.totalorder %s233, %s235
      %p242 = scmp.eq.s32.totalorder %s36, 1
      %p243 = por %p241, %p242
      %p244 = scmp.ne.s32.totalorder %s235, %s236
      %p245 = scmp.eq.s32.totalorder %s36, 0
      %p246 = por %p244, %p245
      %p247 = scmp.ne.s32.totalorder %s235, %s236
      %p248 = scmp.eq.s32.totalorder %s37, 1
      %p249 = por %p247, %p248
      %p251 = scmp.ne.s32.totalorder %s236, %s250
      %p252 = scmp.eq.s32.totalorder %s37, 0
      %p253 = por %p251, %p252
      %s255 = sadd.s32 %s254, 1
      %p258 = scmp.eq.s32.totalorder %s31, 1
      %p259 = scmp.ne.s32.totalorder %s254, %s256
      %p260 = scmp.eq.s32.totalorder %s31, 0
      %p261 = por %p259, %p260
      %p262 = scmp.ne.s32.totalorder %s254, %s256
      %p263 = scmp.eq.s32.totalorder %s36, 1
      %p264 = por %p262, %p263
      %p265 = scmp.ne.s32.totalorder %s256, %s257
      %p266 = scmp.eq.s32.totalorder %s36, 0
      %p267 = por %p265, %p266
      %p268 = scmp.ne.s32.totalorder %s256, %s257
      %p269 = scmp.eq.s32.totalorder %s37, 1
      %p270 = por %p268, %p269
      %p272 = scmp.ne.s32.totalorder %s257, %s271
      %p273 = scmp.eq.s32.totalorder %s37, 0
      %p274 = por %p272, %p273
      %s276 = sadd.s32 %s275, 1
      %p279 = scmp.eq.s32.totalorder %s31, 1
      %p280 = scmp.ne.s32.totalorder %s275, %s277
      %p281 = scmp.eq.s32.totalorder %s31, 0
      %p282 = por %p280, %p281
      %p283 = scmp.ne.s32.totalorder %s275, %s277
      %p284 = scmp.eq.s32.totalorder %s36, 1
      %p285 = por %p283, %p284
      %p286 = scmp.ne.s32.totalorder %s277, %s278
      %p287 = scmp.eq.s32.totalorder %s36, 0
      %p288 = por %p286, %p287
      %p289 = scmp.ne.s32.totalorder %s277, %s278
      %p290 = scmp.eq.s32.totalorder %s37, 1
      %p291 = por %p289, %p290
      %p293 = scmp.ne.s32.totalorder %s278, %s292
      %p294 = scmp.eq.s32.totalorder %s37, 0
      %p295 = por %p293, %p294
      %s297 = sadd.s32 %s296, 1
      %p300 = scmp.eq.s32.totalorder %s31, 1
      %p301 = scmp.ne.s32.totalorder %s296, %s298
      %p302 = scmp.eq.s32.totalorder %s31, 0
      %p303 = por %p301, %p302
      %p304 = scmp.ne.s32.totalorder %s296, %s298
      %p305 = scmp.eq.s32.totalorder %s36, 1
      %p306 = por %p304, %p305
      %p307 = scmp.ne.s32.totalorder %s298, %s299
      %p308 = scmp.eq.s32.totalorder %s36, 0
      %p309 = por %p307, %p308
      %p310 = scmp.ne.s32.totalorder %s298, %s299
      %p311 = scmp.eq.s32.totalorder %s37, 1
      %p312 = por %p310, %p311
      %p314 = scmp.ne.s32.totalorder %s299, %s313
      %p315 = scmp.eq.s32.totalorder %s37, 0
      %p316 = por %p314, %p315
      %s317 = ssub.s32 %s31, %s38
      %p318 = scmp.eq.s32.totalorder %s317, 0
      %s320 = sadd.s32 %s319, 1
      %s321 = scalar_select %p318, %s319, %s320
      %p324 = pneg %p318
      %p325 = scmp.eq.s32.totalorder %s31, 1
      %p326 = por %p324, %p325
      %p327 = scmp.ne.s32.totalorder %s319, %s322
      %p328 = scmp.eq.s32.totalorder %s31, 0
      %p329 = por %p327, %p328
      %p330 = scmp.ne.s32.totalorder %s319, %s322
      %p331 = scmp.eq.s32.totalorder %s36, 1
      %p332 = por %p330, %p331
      %p333 = scmp.ne.s32.totalorder %s322, %s323
      %p334 = scmp.eq.s32.totalorder %s36, 0
      %p335 = por %p333, %p334
      %p336 = scmp.ne.s32.totalorder %s322, %s323
      %p337 = scmp.eq.s32.totalorder %s37, 1
      %p338 = por %p336, %p337
      %p340 = scmp.ne.s32.totalorder %s323, %s339
      %p341 = scmp.eq.s32.totalorder %s37, 0
      %p342 = por %p340, %p341
      %p343 = scmp.le.s32.totalorder 1, %s31
      %p344 = scmp.lt.s32.totalorder %s31, 3
      %p345 = pnand %p343, %p344
      %p346 = pneg %p345
      // Predicated region
      $region9: #{tpu_custom_call.1} parent=5 // pred_check
        _
      $region10: #{tpu_custom_call.1} parent=5 // pred_check_branch
        %348 = sbr.rel (%p345) target = $region12
      $region11: #{tpu_custom_call.1} parent=5 // pred_region
        %s349 = ssub.s32 %s31, 1
        // Predicated region
        $region13: #{tpu_custom_call.1} parent=11 // pred_check
          %p350 = pneg %p78
        $region14: #{tpu_custom_call.1} parent=11 // pred_check_branch
          %352 = sbr.rel (%p350) target = $region16
        $region15: #{tpu_custom_call.1} parent=11 // pred_region
          %s354 = ssub.s32 3072, 3072
          %355 = vsyncadd [#allocation6], %s354
          %s356 = sshll.u32 [#allocation5], 4
          %s357 = int_to_ptr.vmem [resolvable:$true] %s356
          %362 = dma.hbm_to_vmem [thread:$0]  %s1, 3072, %s357, [#allocation6], 192, 192, 12
        $region16: #{tpu_custom_call.1} parent=11 // pred_fallthru
          _
        // Predicated region
        $region17: #{tpu_custom_call.1} parent=11 // pred_check
          %p363 = pneg %p99
        $region18: #{tpu_custom_call.1} parent=11 // pred_check_branch
          %365 = sbr.rel (%p363) target = $region20
        $region19: #{tpu_custom_call.1} parent=11 // pred_region
          %s367 = ssub.s32 48, 48
          %368 = vsyncadd [#allocation6], %s367
          %s370 = sshll.u32 [#allocation7], 4
          %s371 = int_to_ptr.vmem [resolvable:$true] %s370
          %373 = dma.hbm_to_vmem [thread:$0]  %s2, 48, %s371, [#allocation6]
        $region20: #{tpu_custom_call.1} parent=11 // pred_fallthru
          _
        // Predicated region
        $region21: #{tpu_custom_call.1} parent=11 // pred_check
          %p374 = pneg %p120
        $region22: #{tpu_custom_call.1} parent=11 // pred_check_branch
          %376 = sbr.rel (%p374) target = $region24
        $region23: #{tpu_custom_call.1} parent=11 // pred_region
          %s378 = ssub.s32 1024, 1024
          %379 = vsyncadd [#allocation9], %s378
          %s380 = sshll.u32 [#allocation8], 4
          %s381 = int_to_ptr.vmem [resolvable:$true] %s380
          %386 = dma.hbm_to_vmem [thread:$0]  %s3, 1024, %s381, [#allocation9], 64, 64, 4
        $region24: #{tpu_custom_call.1} parent=11 // pred_fallthru
          _
        // Predicated region
        $region25: #{tpu_custom_call.1} parent=11 // pred_check
          %p387 = pneg %p141
        $region26: #{tpu_custom_call.1} parent=11 // pred_check_branch
          %389 = sbr.rel (%p387) target = $region28
        $region27: #{tpu_custom_call.1} parent=11 // pred_region
          %s391 = ssub.s32 16, 16
          %392 = vsyncadd [#allocation9], %s391
          %s394 = sshll.u32 [#allocation10], 4
          %s395 = int_to_ptr.vmem [resolvable:$true] %s394
          %397 = dma.hbm_to_vmem [thread:$0]  %s4, 16, %s395, [#allocation9]
        $region28: #{tpu_custom_call.1} parent=11 // pred_fallthru
          _
        // Predicated region
        $region29: #{tpu_custom_call.1} parent=11 // pred_check
          %p398 = pneg %p162
        $region30: #{tpu_custom_call.1} parent=11 // pred_check_branch
          %400 = sbr.rel (%p398) target = $region32
        $region31: #{tpu_custom_call.1} parent=11 // pred_region
          %s402 = ssub.s32 16, 16
          %403 = vsyncadd [#allocation12], %s402
          %s405 = sshll.u32 [#allocation11], 4
          %s406 = int_to_ptr.vmem [resolvable:$true] %s405
          %408 = dma.hbm_to_vmem [thread:$0]  %s5, 16, %s406, [#allocation12]
        $region32: #{tpu_custom_call.1} parent=11 // pred_fallthru
          _
        // Predicated region
        $region33: #{tpu_custom_call.1} parent=11 // pred_check
          %p409 = pneg %p183
        $region34: #{tpu_custom_call.1} parent=11 // pred_check_branch
          %411 = sbr.rel (%p409) target = $region36
        $region35: #{tpu_custom_call.1} parent=11 // pred_region
          %s413 = ssub.s32 16, 16
          %414 = vsyncadd [#allocation12], %s413
          %s416 = sshll.u32 [#allocation13], 4
          %s417 = int_to_ptr.vmem [resolvable:$true] %s416
          %419 = dma.hbm_to_vmem [thread:$0]  %s6, 16, %s417, [#allocation12]
        $region36: #{tpu_custom_call.1} parent=11 // pred_fallthru
          _
        // Predicated region
        $region37: #{tpu_custom_call.1} parent=11 // pred_check
          %p420 = pneg %p204
        $region38: #{tpu_custom_call.1} parent=11 // pred_check_branch
          %422 = sbr.rel (%p420) target = $region40
        $region39: #{tpu_custom_call.1} parent=11 // pred_region
          %s424 = ssub.s32 2048, 2048
          %425 = vsyncadd [#allocation15], %s424
          %s426 = sshll.u32 [#allocation14], 4
          %s427 = int_to_ptr.vmem [resolvable:$true] %s426
          %432 = dma.hbm_to_vmem [thread:$0]  %s7, 2048, %s427, [#allocation15], 128, 128, 8
        $region40: #{tpu_custom_call.1} parent=11 // pred_fallthru
          _
        // Predicated region
        $region41: #{tpu_custom_call.1} parent=11 // pred_check
          %p433 = pneg %p225
        $region42: #{tpu_custom_call.1} parent=11 // pred_check_branch
          %435 = sbr.rel (%p433) target = $region44
        $region43: #{tpu_custom_call.1} parent=11 // pred_region
          %s437 = ssub.s32 32, 32
          %438 = vsyncadd [#allocation15], %s437
          %s440 = sshll.u32 [#allocation16], 4
          %s441 = int_to_ptr.vmem [resolvable:$true] %s440
          %443 = dma.hbm_to_vmem [thread:$0]  %s8, 32, %s441, [#allocation15]
        $region44: #{tpu_custom_call.1} parent=11 // pred_fallthru
          _
        // Predicated region
        $region45: #{tpu_custom_call.1} parent=11 // pred_check
          %p444 = pneg %p246
        $region46: #{tpu_custom_call.1} parent=11 // pred_check_branch
          %446 = sbr.rel (%p444) target = $region48
        $region47: #{tpu_custom_call.1} parent=11 // pred_region
          %s448 = ssub.s32 2048, 2048
          %449 = vsyncadd [#allocation18], %s448
          %s450 = sshll.u32 [#allocation17], 4
          %s451 = int_to_ptr.vmem [resolvable:$true] %s450
          %456 = dma.hbm_to_vmem [thread:$0]  %s9, 2048, %s451, [#allocation18], 64, 64, 4
        $region48: #{tpu_custom_call.1} parent=11 // pred_fallthru
          _
        // Predicated region
        $region49: #{tpu_custom_call.1} parent=11 // pred_check
          %p457 = pneg %p267
        $region50: #{tpu_custom_call.1} parent=11 // pred_check_branch
          %459 = sbr.rel (%p457) target = $region52
        $region51: #{tpu_custom_call.1} parent=11 // pred_region
          %s461 = ssub.s32 16, 16
          %462 = vsyncadd [#allocation18], %s461
          %s464 = sshll.u32 [#allocation19], 4
          %s465 = int_to_ptr.vmem [resolvable:$true] %s464
          %467 = dma.hbm_to_vmem [thread:$0]  %s10, 16, %s465, [#allocation18]
        $region52: #{tpu_custom_call.1} parent=11 // pred_fallthru
          _
        // Predicated region
        $region53: #{tpu_custom_call.1} parent=11 // pred_check
          %p468 = pneg %p288
        $region54: #{tpu_custom_call.1} parent=11 // pred_check_branch
          %470 = sbr.rel (%p468) target = $region56
        $region55: #{tpu_custom_call.1} parent=11 // pred_region
          %s472 = ssub.s32 16, 16
          %473 = vsyncadd [#allocation21], %s472
          %s475 = sshll.u32 [#allocation20], 4
          %s476 = int_to_ptr.vmem [resolvable:$true] %s475
          %478 = dma.hbm_to_vmem [thread:$0]  %s11, 16, %s476, [#allocation21]
        $region56: #{tpu_custom_call.1} parent=11 // pred_fallthru
          _
        // Predicated region
        $region57: #{tpu_custom_call.1} parent=11 // pred_check
          %p479 = pneg %p309
        $region58: #{tpu_custom_call.1} parent=11 // pred_check_branch
          %481 = sbr.rel (%p479) target = $region60
        $region59: #{tpu_custom_call.1} parent=11 // pred_region
          %s483 = ssub.s32 16, 16
          %484 = vsyncadd [#allocation21], %s483
          %s486 = sshll.u32 [#allocation22], 4
          %s487 = int_to_ptr.vmem [resolvable:$true] %s486
          %489 = dma.hbm_to_vmem [thread:$0]  %s12, 16, %s487, [#allocation21]
        $region60: #{tpu_custom_call.1} parent=11 // pred_fallthru
          _
      $region12: #{tpu_custom_call.1} parent=5 // pred_fallthru
        _
      %p490 = scmp.lt.s32.totalorder %s31, 2
      // Predicated region
      $region61: #{tpu_custom_call.1} parent=5 // pred_check
        %p491 = pneg %p490
      $region62: #{tpu_custom_call.1} parent=5 // pred_check_branch
        %493 = sbr.rel (%p491) target = $region64
      $region63: #{tpu_custom_call.1} parent=5 // pred_region
        // Predicated region
        $region65: #{tpu_custom_call.1} parent=63 // pred_check
          %p494 = pneg %p51
        $region66: #{tpu_custom_call.1} parent=63 // pred_check_branch
          %496 = sbr.rel (%p494) target = $region68
        $region67: #{tpu_custom_call.1} parent=63 // pred_region
          %s497 = sand.u32 %s41, 1
          %s498 = scalar_lea.sflag [#allocation3], %s497
          %s499 = sand.u32 %s41, 1
          %s500 = smul.addr %s499, 32
          %s501 = scalar_lea.vmem [#allocation2], %s500
          %s502 = smul.u32 2, %s31
          %s504 = ssub.s32 512, 512
          %505 = vsyncadd %s498, %s504
          %s506 = smul.addr %s502, 2
          %s507 = smul.addr %s506, 128
          %s508 = scalar_lea.hbm %s0, %s507
          %s509 = sshll.u32 %s501, 4
          %s510 = int_to_ptr.vmem [resolvable:$true] %s509
          %515 = dma.hbm_to_vmem [thread:$0]  %s508, 512, %s510, %s498, 128, 128, 8
        $region68: #{tpu_custom_call.1} parent=63 // pred_fallthru
          _
      $region64: #{tpu_custom_call.1} parent=5 // pred_fallthru
        _
      %p516 = scmp.le.s32.totalorder 1, %s31
      %p517 = scmp.lt.s32.totalorder %s31, 3
      %p518 = pnand %p516, %p517
      %p519 = pneg %p518
      // Predicated region
      $region69: #{tpu_custom_call.1} parent=5 // pred_check
        _
      $region70: #{tpu_custom_call.1} parent=5 // pred_check_branch
        %521 = sbr.rel (%p518) target = $region72
      $region71: #{tpu_custom_call.1} parent=5 // pred_region
        %s522 = ssub.s32 %s31, 1
        %s523 = sand.u32 %s44, 1
        %s524 = scalar_lea.sflag [#allocation3], %s523
        %s525 = sand.u32 %s44, 1
        %s526 = smul.addr %s525, 32
        %s527 = scalar_lea.vmem [#allocation2], %s526
        // Predicated region
        $region73: #{tpu_custom_call.1} parent=71 // pred_check
          %p528 = pneg %p57
        $region74: #{tpu_custom_call.1} parent=71 // pred_check_branch
          %530 = sbr.rel (%p528) target = $region76
        $region75: #{tpu_custom_call.1} parent=71 // pred_region
          %531 = dma.done %s524, 512
        $region76: #{tpu_custom_call.1} parent=71 // pred_fallthru
          _
        // Predicated region
        $region77: #{tpu_custom_call.1} parent=71 // pred_check
          %p532 = pneg %p78
        $region78: #{tpu_custom_call.1} parent=71 // pred_check_branch
          %534 = sbr.rel (%p532) target = $region80
        $region79: #{tpu_custom_call.1} parent=71 // pred_region
          %535 = dma.done [#allocation6], 3072
        $region80: #{tpu_custom_call.1} parent=71 // pred_fallthru
          _
        // Predicated region
        $region81: #{tpu_custom_call.1} parent=71 // pred_check
          %p536 = pneg %p99
        $region82: #{tpu_custom_call.1} parent=71 // pred_check_branch
          %538 = sbr.rel (%p536) target = $region84
        $region83: #{tpu_custom_call.1} parent=71 // pred_region
          %539 = dma.done [#allocation6], 48
        $region84: #{tpu_custom_call.1} parent=71 // pred_fallthru
          _
        // Predicated region
        $region85: #{tpu_custom_call.1} parent=71 // pred_check
          %p540 = pneg %p120
        $region86: #{tpu_custom_call.1} parent=71 // pred_check_branch
          %542 = sbr.rel (%p540) target = $region88
        $region87: #{tpu_custom_call.1} parent=71 // pred_region
          %543 = dma.done [#allocation9], 1024
        $region88: #{tpu_custom_call.1} parent=71 // pred_fallthru
          _
        // Predicated region
        $region89: #{tpu_custom_call.1} parent=71 // pred_check
          %p544 = pneg %p141
        $region90: #{tpu_custom_call.1} parent=71 // pred_check_branch
          %546 = sbr.rel (%p544) target = $region92
        $region91: #{tpu_custom_call.1} parent=71 // pred_region
          %547 = dma.done [#allocation9], 16
        $region92: #{tpu_custom_call.1} parent=71 // pred_fallthru
          _
        // Predicated region
        $region93: #{tpu_custom_call.1} parent=71 // pred_check
          %p548 = pneg %p162
        $region94: #{tpu_custom_call.1} parent=71 // pred_check_branch
          %550 = sbr.rel (%p548) target = $region96
        $region95: #{tpu_custom_call.1} parent=71 // pred_region
          %551 = dma.done [#allocation12], 16
        $region96: #{tpu_custom_call.1} parent=71 // pred_fallthru
          _
        // Predicated region
        $region97: #{tpu_custom_call.1} parent=71 // pred_check
          %p552 = pneg %p183
        $region98: #{tpu_custom_call.1} parent=71 // pred_check_branch
          %554 = sbr.rel (%p552) target = $region100
        $region99: #{tpu_custom_call.1} parent=71 // pred_region
          %555 = dma.done [#allocation12], 16
        $region100: #{tpu_custom_call.1} parent=71 // pred_fallthru
          _
        // Predicated region
        $region101: #{tpu_custom_call.1} parent=71 // pred_check
          %p556 = pneg %p204
        $region102: #{tpu_custom_call.1} parent=71 // pred_check_branch
          %558 = sbr.rel (%p556) target = $region104
        $region103: #{tpu_custom_call.1} parent=71 // pred_region
          %559 = dma.done [#allocation15], 2048
        $region104: #{tpu_custom_call.1} parent=71 // pred_fallthru
          _
        // Predicated region
        $region105: #{tpu_custom_call.1} parent=71 // pred_check
          %p560 = pneg %p225
        $region106: #{tpu_custom_call.1} parent=71 // pred_check_branch
          %562 = sbr.rel (%p560) target = $region108
        $region107: #{tpu_custom_call.1} parent=71 // pred_region
          %563 = dma.done [#allocation15], 32
        $region108: #{tpu_custom_call.1} parent=71 // pred_fallthru
          _
        // Predicated region
        $region109: #{tpu_custom_call.1} parent=71 // pred_check
          %p564 = pneg %p246
        $region110: #{tpu_custom_call.1} parent=71 // pred_check_branch
          %566 = sbr.rel (%p564) target = $region112
        $region111: #{tpu_custom_call.1} parent=71 // pred_region
          %567 = dma.done [#allocation18], 2048
        $region112: #{tpu_custom_call.1} parent=71 // pred_fallthru
          _
        // Predicated region
        $region113: #{tpu_custom_call.1} parent=71 // pred_check
          %p568 = pneg %p267
        $region114: #{tpu_custom_call.1} parent=71 // pred_check_branch
          %570 = sbr.rel (%p568) target = $region116
        $region115: #{tpu_custom_call.1} parent=71 // pred_region
          %571 = dma.done [#allocation18], 16
        $region116: #{tpu_custom_call.1} parent=71 // pred_fallthru
          _
        // Predicated region
        $region117: #{tpu_custom_call.1} parent=71 // pred_check
          %p572 = pneg %p288
        $region118: #{tpu_custom_call.1} parent=71 // pred_check_branch
          %574 = sbr.rel (%p572) target = $region120
        $region119: #{tpu_custom_call.1} parent=71 // pred_region
          %575 = dma.done [#allocation21], 16
        $region120: #{tpu_custom_call.1} parent=71 // pred_fallthru
          _
        // Predicated region
        $region121: #{tpu_custom_call.1} parent=71 // pred_check
          %p576 = pneg %p309
        $region122: #{tpu_custom_call.1} parent=71 // pred_check_branch
          %578 = sbr.rel (%p576) target = $region124
        $region123: #{tpu_custom_call.1} parent=71 // pred_region
          %579 = dma.done [#allocation21], 16
        $region124: #{tpu_custom_call.1} parent=71 // pred_fallthru
          _
        %s580 = sand.u32 %s44, 1
        %s581 = scalar_lea.sflag [#allocation3], %s580
        %s582 = sand.u32 %s44, 1
        %s583 = smul.addr %s582, 32
        %s584 = scalar_lea.vmem [#allocation2], %s583
        %p585 = pneg %p57
        %p586 = pneg %p54
        %p587 = pneg %p78
        %p588 = pneg %p75
        %p589 = pneg %p99
        %p590 = pneg %p96
        %p591 = pneg %p120
        %p592 = pneg %p117
        %p593 = pneg %p141
        %p594 = pneg %p138
        %p595 = pneg %p162
        %p596 = pneg %p159
        %p597 = pneg %p183
        %p598 = pneg %p180
        %p599 = pneg %p204
        %p600 = pneg %p201
        %p601 = pneg %p225
        %p602 = pneg %p222
        %p603 = pneg %p246
        %p604 = pneg %p243
        %p605 = pneg %p267
        %p606 = pneg %p264
        %p607 = pneg %p288
        %p608 = pneg %p285
        %p609 = pneg %p309
        %p610 = pneg %p306
        %p611 = pneg %p335
        %p612 = pneg %p332
        %s613 = sand.u32 %s322, 1
        %s614 = scalar_lea.sflag [#allocation4], %s613
        %s615 = sand.u32 %s322, 1
        %s616 = smul.addr %s615, 32
        %s617 = scalar_lea.vmem [#allocation23], %s616
        %s618 = smul.u32 2, %s36
        %s619 = smul.u32 2, %s36
        %v621 = vld [vmem:[%s527] sm:$0xff]
        %v622 = vld [vmem:[%s527 + $0x8] sm:$0xff]
        %v623 = vld [vmem:[%s527 + $0x10] sm:$0xff]
        %v624 = vld [vmem:[%s527 + $0x18] sm:$0xff]
        %v625 = vpack.c.bf16 %v622, %v621
        %v626 = vpack.c.bf16 %v624, %v623
        %v627 = vld [vmem:[#allocation5] sm:$0xff]
        %v628 = vld [vmem:[#allocation5 + $0x8] sm:$0xf]
        %v629 = vld [vmem:[#allocation5 + $0xc] sm:$0xff]
        %v630 = vld [vmem:[#allocation5 + $0x14] sm:$0xf]
        %v631 = vld [vmem:[#allocation5 + $0x18] sm:$0xff]
        %v632 = vld [vmem:[#allocation5 + $0x20] sm:$0xf]
        %v633 = vld [vmem:[#allocation5 + $0x24] sm:$0xff]
        %v634 = vld [vmem:[#allocation5 + $0x2c] sm:$0xf]
        %v635 = vld [vmem:[#allocation5 + $0x30] sm:$0xff]
        %v636 = vld [vmem:[#allocation5 + $0x38] sm:$0xf]
        %v637 = vld [vmem:[#allocation5 + $0x3c] sm:$0xff]
        %v638 = vld [vmem:[#allocation5 + $0x44] sm:$0xf]
        %v639 = vld [vmem:[#allocation5 + $0x48] sm:$0xff]
        %v640 = vld [vmem:[#allocation5 + $0x50] sm:$0xf]
        %v641 = vld [vmem:[#allocation5 + $0x54] sm:$0xff]
        %v642 = vld [vmem:[#allocation5 + $0x5c] sm:$0xf]
        %v643 = vld [vmem:[#allocation5 + $0x60] sm:$0xff]
        %v644 = vld [vmem:[#allocation5 + $0x68] sm:$0xf]
        %v645 = vld [vmem:[#allocation5 + $0x6c] sm:$0xff]
        %v646 = vld [vmem:[#allocation5 + $0x74] sm:$0xf]
        %v647 = vld [vmem:[#allocation5 + $0x78] sm:$0xff]
        %v648 = vld [vmem:[#allocation5 + $0x80] sm:$0xf]
        %v649 = vld [vmem:[#allocation5 + $0x84] sm:$0xff]
        %v650 = vld [vmem:[#allocation5 + $0x8c] sm:$0xf]
        %v651 = vld [vmem:[#allocation5 + $0x90] sm:$0xff]
        %v652 = vld [vmem:[#allocation5 + $0x98] sm:$0xf]
        %v653 = vld [vmem:[#allocation5 + $0x9c] sm:$0xff]
        %v654 = vld [vmem:[#allocation5 + $0xa4] sm:$0xf]
        %v655 = vld [vmem:[#allocation5 + $0xa8] sm:$0xff]
        %v656 = vld [vmem:[#allocation5 + $0xb0] sm:$0xf]
        %v657 = vld [vmem:[#allocation5 + $0xb4] sm:$0xff]
        %v658 = vld [vmem:[#allocation5 + $0xbc] sm:$0xf]
        %v659 = vld [vmem:[#allocation7] sm:$0x7]
        %v661 = vlaneseq
        %v662 = vshrl.u32 %v661, 7
        %v663 = vsub.s32 0, %v662
        %v664 = vrot.slane %v659, %v663
        %v665 = vlaneseq
        %v666 = vshrl.u32 %v665, 7
        %v667 = vsub.s32 1, %v666
        %v668 = vrot.slane %v659, %v667
        %v669 = vlaneseq
        %v670 = vshrl.u32 %v669, 7
        %v671 = vsub.s32 2, %v670
        %v672 = vrot.slane %v659, %v671
        %v708 = vunpack.c.l.b16 %v627
        %v709 = vunpack.c.h.b16 %v627
        %v710 = vunpack.c.l.b16 %v628
        %v711 = vunpack.c.l.b16 %v629
        %v712 = vunpack.c.h.b16 %v629
        %v713 = vunpack.c.l.b16 %v630
        %v714 = vunpack.c.l.b16 %v631
        %v715 = vunpack.c.h.b16 %v631
        %v716 = vunpack.c.l.b16 %v632
        %v717 = vunpack.c.l.b16 %v633
        %v718 = vunpack.c.h.b16 %v633
        %v719 = vunpack.c.l.b16 %v634
        %v720 = vunpack.c.l.b16 %v635
        %v721 = vunpack.c.h.b16 %v635
        %v722 = vunpack.c.l.b16 %v636
        %v723 = vunpack.c.l.b16 %v637
        %v724 = vunpack.c.h.b16 %v637
        %v725 = vunpack.c.l.b16 %v638
        %v726 = vunpack.c.l.b16 %v639
        %v727 = vunpack.c.h.b16 %v639
        %v728 = vunpack.c.l.b16 %v640
        %v729 = vunpack.c.l.b16 %v641
        %v730 = vunpack.c.h.b16 %v641
        %v731 = vunpack.c.l.b16 %v642
        %v732 = vunpack.c.l.b16 %v643
        %v733 = vunpack.c.h.b16 %v643
        %v734 = vunpack.c.l.b16 %v644
        %v735 = vunpack.c.l.b16 %v645
        %v736 = vunpack.c.h.b16 %v645
        %v737 = vunpack.c.l.b16 %v646
        %v738 = vunpack.c.l.b16 %v647
        %v739 = vunpack.c.h.b16 %v647
        %v740 = vunpack.c.l.b16 %v648
        %v741 = vunpack.c.l.b16 %v649
        %v742 = vunpack.c.h.b16 %v649
        %v743 = vunpack.c.l.b16 %v650
        %v744 = vunpack.c.l.b16 %v651
        %v745 = vunpack.c.h.b16 %v651
        %v746 = vunpack.c.l.b16 %v652
        %v747 = vunpack.c.l.b16 %v653
        %v748 = vunpack.c.h.b16 %v653
        %v749 = vunpack.c.l.b16 %v654
        %v750 = vunpack.c.l.b16 %v655
        %v751 = vunpack.c.h.b16 %v655
        %v752 = vunpack.c.l.b16 %v656
        %v753 = vunpack.c.l.b16 %v657
        %v754 = vunpack.c.h.b16 %v657
        %v755 = vunpack.c.l.b16 %v658
        %v756 = vpack.c.b16 %v711, %v708
        %v757 = vpack.c.b16 %v712, %v709
        %v758 = vpack.c.b16 %v713, %v710
        %v759 = vpack.c.b16 %v717, %v714
        %v760 = vpack.c.b16 %v718, %v715
        %v761 = vpack.c.b16 %v719, %v716
        %v762 = vpack.c.b16 %v723, %v720
        %v763 = vpack.c.b16 %v724, %v721
        %v764 = vpack.c.b16 %v725, %v722
        %v765 = vpack.c.b16 %v729, %v726
        %v766 = vpack.c.b16 %v730, %v727
        %v767 = vpack.c.b16 %v731, %v728
        %v768 = vpack.c.b16 %v735, %v732
        %v769 = vpack.c.b16 %v736, %v733
        %v770 = vpack.c.b16 %v737, %v734
        %v771 = vpack.c.b16 %v741, %v738
        %v772 = vpack.c.b16 %v742, %v739
        %v773 = vpack.c.b16 %v743, %v740
        %v774 = vpack.c.b16 %v747, %v744
        %v775 = vpack.c.b16 %v748, %v745
        %v776 = vpack.c.b16 %v749, %v746
        %v777 = vpack.c.b16 %v753, %v750
        %v778 = vpack.c.b16 %v754, %v751
        %v779 = vpack.c.b16 %v755, %v752
        %804 = vmatprep.subr.bf16.mxu0 %v757
        %805 = vmatpush1.bf16.msra.mxu0 %v756
        %806 = vmatprep.subr.bf16.mxu0 %v760
        %807 = vmatpush1.bf16.msra.mxu0 %v759
        %808 = vmatprep.subr.bf16.mxu0 %v763
        %809 = vmatpush1.bf16.msra.mxu0 %v762
        %810 = vmatprep.subr.bf16.mxu0 %v766
        %811 = vmatpush1.bf16.msra.mxu0 %v765
        %812 = vmatprep.subr.bf16.mxu0 %v769
        %813 = vmatpush1.bf16.msra.mxu0 %v768
        %814 = vmatprep.subr.bf16.mxu0 %v772
        %815 = vmatpush1.bf16.msra.mxu0 %v771
        %816 = vmatprep.subr.bf16.mxu0 %v775
        %817 = vmatpush1.bf16.msra.mxu0 %v774
        %818 = vmatprep.subr.bf16.mxu0 %v778
        %819 = vmatpush1.bf16.msra.mxu0 %v777
        %820 = vmatprep.subr.bf16.mxu0 0
        %821 = vmatpush1.bf16.msra.mxu0 0
        %822 = vmatprep.subr.bf16.mxu0 0
        %823 = vmatpush1.bf16.msra.mxu0 0
        %824 = vmatprep.subr.bf16.mxu0 0
        %825 = vmatpush1.bf16.msra.mxu0 0
        %826 = vmatprep.subr.bf16.mxu0 0
        %827 = vmatpush1.bf16.msra.mxu0 0
        %828 = vmatprep.subr.bf16.mxu0 0
        %829 = vmatpush1.bf16.msra.mxu0 0
        %830 = vmatprep.subr.bf16.mxu0 0
        %831 = vmatpush1.bf16.msra.mxu0 0
        %832 = vmatprep.subr.bf16.mxu0 0
        %833 = vmatpush1.bf16.msra.mxu0 0
        %834 = vmatprep.subr.bf16.mxu0 0
        %835 = vmatpush1.bf16.msra.mxu0 0
        %836 = vmatprep.mubr.bf16.mxu0 0
        %837 = vmatmul.mubr.bf16.gmra.mrb[0].mxu0 %v625
        %v838 = vpop.f32.mrb[0].mxu0
        %v839 = vadd.f32 %v664, %v838
        %v840 = vpop.f32.mrb[0].mxu0
        %v841 = vadd.f32 %v668, %v840
        %v842 = vpop.f32.mrb[0].mxu0
        %v843 = vadd.f32 %v664, %v842
        %v844 = vpop.f32.mrb[0].mxu0
        %v845 = vadd.f32 %v668, %v844
        %846 = vmatprep.mubr.bf16.mxu0 0
        %847 = vmatmul.mubr.bf16.gmra.mrb[0].mxu0 %v626
        %v848 = vpop.f32.mrb[0].mxu0
        %v849 = vadd.f32 %v664, %v848
        %v850 = vpop.f32.mrb[0].mxu0
        %v851 = vadd.f32 %v668, %v850
        %v852 = vpop.f32.mrb[0].mxu0
        %v853 = vadd.f32 %v664, %v852
        %v854 = vpop.f32.mrb[0].mxu0
        %v855 = vadd.f32 %v668, %v854
        %856 = vdwg.mxu0
        %857 = vmatprep.subr.bf16.mxu0 0
        %858 = vmatpush1.bf16.msra.mxu0 %v758
        %859 = vmatprep.subr.bf16.mxu0 0
        %860 = vmatpush1.bf16.msra.mxu0 %v761
        %861 = vmatprep.subr.bf16.mxu0 0
        %862 = vmatpush1.bf16.msra.mxu0 %v764
        %863 = vmatprep.subr.bf16.mxu0 0
        %864 = vmatpush1.bf16.msra.mxu0 %v767
        %865 = vmatprep.subr.bf16.mxu0 0
        %866 = vmatpush1.bf16.msra.mxu0 %v770
        %867 = vmatprep.subr.bf16.mxu0 0
        %868 = vmatpush1.bf16.msra.mxu0 %v773
        %869 = vmatprep.subr.bf16.mxu0 0
        %870 = vmatpush1.bf16.msra.mxu0 %v776
        %871 = vmatprep.subr.bf16.mxu0 0
        %872 = vmatpush1.bf16.msra.mxu0 %v779
        %873 = vmatprep.subr.bf16.mxu0 0
        %874 = vmatpush1.bf16.msra.mxu0 0
        %875 = vmatprep.subr.bf16.mxu0 0
        %876 = vmatpush1.bf16.msra.mxu0 0
        %877 = vmatprep.subr.bf16.mxu0 0
        %878 = vmatpush1.bf16.msra.mxu0 0
        %879 = vmatprep.subr.bf16.mxu0 0
        %880 = vmatpush1.bf16.msra.mxu0 0
        %881 = vmatprep.subr.bf16.mxu0 0
        %882 = vmatpush1.bf16.msra.mxu0 0
        %883 = vmatprep.subr.bf16.mxu0 0
        %884 = vmatpush1.bf16.msra.mxu0 0
        %885 = vmatprep.subr.bf16.mxu0 0
        %886 = vmatpush1.bf16.msra.mxu0 0
        %887 = vmatprep.subr.bf16.mxu0 0
        %888 = vmatpush1.bf16.msra.mxu0 0
        %889 = vmatprep.mubr.bf16.mxu0 0
        %890 = vmatmul.mubr.bf16.gmra.mrb[0].mxu0 %v625
        %v891 = vpop.f32.mrb[0].mxu0
        %v892 = vadd.f32 %v672, %v891
        %v893 = vpop.f32.mrb[0].mxu0
        %v894 = vpop.f32.mrb[0].mxu0
        %v895 = vadd.f32 %v672, %v894
        %v896 = vpop.f32.mrb[0].mxu0
        %897 = vmatprep.mubr.bf16.mxu0 0
        %898 = vmatmul.mubr.bf16.gmra.mrb[0].mxu0 %v626
        %v899 = vpop.f32.mrb[0].mxu0
        %v900 = vadd.f32 %v672, %v899
        %v901 = vpop.f32.mrb[0].mxu0
        %v902 = vpop.f32.mrb[0].mxu0
        %v903 = vadd.f32 %v672, %v902
        %v904 = vpop.f32.mrb[0].mxu0
        %905 = vdwg.mxu0
        %v906 = vmul.f32 %v839, 0.17677669
        %v907 = vmul.f32 %v843, 0.17677669
        %v908 = vmul.f32 %v849, 0.17677669
        %v909 = vmul.f32 %v853, 0.17677669
        %v910 = vpack.c.bf16 %v907, %v906
        %v911 = vpack.c.bf16 %v909, %v908
        %914 = vrot.lane.b32.xlu0 %v910, 96
        %v915 = vpop.permute.xlu0 %914
        %916 = vrot.lane.b32.xlu0 %v911, 96
        %v917 = vpop.permute.xlu0 %916
        %918 = vrot.lane.b32.xlu0 %v910, 64
        %v919 = vpop.permute.xlu0 %918
        %920 = vrot.lane.b32.xlu0 %v911, 64
        %v921 = vpop.permute.xlu0 %920
        %922 = vrot.lane.b32.xlu0 %v910, 32
        %v923 = vpop.permute.xlu0 %922
        %924 = vrot.lane.b32.xlu0 %v911, 32
        %v925 = vpop.permute.xlu0 %924
        %v926 = vpack.c.bf16 %v845, %v841
        %v927 = vpack.c.bf16 %v855, %v851
        %930 = vrot.lane.b32.xlu0 %v926, 96
        %v931 = vpop.permute.xlu0 %930
        %932 = vrot.lane.b32.xlu0 %v927, 96
        %v933 = vpop.permute.xlu0 %932
        %934 = vrot.lane.b32.xlu0 %v926, 64
        %v935 = vpop.permute.xlu0 %934
        %936 = vrot.lane.b32.xlu0 %v927, 64
        %v937 = vpop.permute.xlu0 %936
        %938 = vrot.lane.b32.xlu0 %v926, 32
        %v939 = vpop.permute.xlu0 %938
        %940 = vrot.lane.b32.xlu0 %v927, 32
        %v941 = vpop.permute.xlu0 %940
        %v942 = vpack.c.bf16 %v895, %v892
        %v943 = vpack.c.bf16 %v903, %v900
        %946 = vrot.lane.b32.xlu0 %v942, 96
        %v947 = vpop.permute.xlu0 %946
        %948 = vrot.lane.b32.xlu0 %v943, 96
        %v949 = vpop.permute.xlu0 %948
        %952 = vrot.lane.b32.xlu0 %v942, 64
        %v953 = vpop.permute.xlu0 %952
        %954 = vrot.lane.b32.xlu0 %v943, 64
        %v955 = vpop.permute.xlu0 %954
        %958 = vrot.lane.b32.xlu0 %v942, 32
        %v959 = vpop.permute.xlu0 %958
        %960 = vrot.lane.b32.xlu0 %v943, 32
        %v961 = vpop.permute.xlu0 %960
        %vm964 = vcmask 261120
        %v966 = vsel %vm964, %v910, 0
        %v969 = vsel %vm964, %v926, 0
        %971 = vmatprep.subr.bf16.mxu0 0
        %972 = vmatpush1.bf16.xpose.msra.mxu0 %v969
        %973 = vmatprep.subr.bf16.mxu0 0
        %974 = vmatpush1.bf16.xpose.msra.mxu0 0
        %975 = vmatprep.subr.bf16.mxu0 0
        %976 = vmatpush1.bf16.xpose.msra.mxu0 0
        %977 = vmatprep.subr.bf16.mxu0 0
        %978 = vmatpush1.bf16.xpose.msra.mxu0 0
        %979 = vmatprep.subr.bf16.mxu0 0
        %980 = vmatpush1.bf16.xpose.msra.mxu0 0
        %981 = vmatprep.subr.bf16.mxu0 0
        %982 = vmatpush1.bf16.xpose.msra.mxu0 0
        %983 = vmatprep.subr.bf16.mxu0 0
        %984 = vmatpush1.bf16.xpose.msra.mxu0 0
        %985 = vmatprep.subr.bf16.mxu0 0
        %986 = vmatpush1.bf16.xpose.msra.mxu0 0
        %987 = vmatprep.subr.bf16.mxu0 0
        %988 = vmatpush1.bf16.xpose.msra.mxu0 0
        %989 = vmatprep.subr.bf16.mxu0 0
        %990 = vmatpush1.bf16.xpose.msra.mxu0 0
        %991 = vmatprep.subr.bf16.mxu0 0
        %992 = vmatpush1.bf16.xpose.msra.mxu0 0
        %993 = vmatprep.subr.bf16.mxu0 0
        %994 = vmatpush1.bf16.xpose.msra.mxu0 0
        %995 = vmatprep.subr.bf16.mxu0 0
        %996 = vmatpush1.bf16.xpose.msra.mxu0 0
        %997 = vmatprep.subr.bf16.mxu0 0
        %998 = vmatpush1.bf16.xpose.msra.mxu0 0
        %999 = vmatprep.subr.bf16.mxu0 0
        %1000 = vmatpush1.bf16.xpose.msra.mxu0 0
        %1001 = vmatprep.subr.bf16.mxu0 0
        %1002 = vmatpush1.bf16.xpose.msra.mxu0 0
        %1003 = vmatprep.mubr.bf16.mxu0 0
        %1004 = vmatmul.mubr.bf16.gmra.mrb[0].mxu0 %v966
        %v1005 = vpop.f32.mrb[0].mxu0
        %v1006 = vadd.f32 0.0, %v1005
        %v1007 = vpop.f32.mrb[0].mxu0
        %v1008 = vpop.f32.mrb[0].mxu0
        %v1009 = vadd.f32 0.0, %v1008
        %v1010 = vpop.f32.mrb[0].mxu0
        %1011 = vdwg.mxu0
        %v1013 = vsel %vm964, %v911, 0
        %v1016 = vsel %vm964, %v927, 0
        %1018 = vmatprep.subr.bf16.mxu0 0
        %1019 = vmatpush1.bf16.xpose.msra.mxu0 %v1016
        %1020 = vmatprep.subr.bf16.mxu0 0
        %1021 = vmatpush1.bf16.xpose.msra.mxu0 0
        %1022 = vmatprep.subr.bf16.mxu0 0
        %1023 = vmatpush1.bf16.xpose.msra.mxu0 0
        %1024 = vmatprep.subr.bf16.mxu0 0
        %1025 = vmatpush1.bf16.xpose.msra.mxu0 0
        %1026 = vmatprep.subr.bf16.mxu0 0
        %1027 = vmatpush1.bf16.xpose.msra.mxu0 0
        %1028 = vmatprep.subr.bf16.mxu0 0
        %1029 = vmatpush1.bf16.xpose.msra.mxu0 0
        %1030 = vmatprep.subr.bf16.mxu0 0
        %1031 = vmatpush1.bf16.xpose.msra.mxu0 0
        %1032 = vmatprep.subr.bf16.mxu0 0
        %1033 = vmatpush1.bf16.xpose.msra.mxu0 0
        %1034 = vmatprep.subr.bf16.mxu0 0
        %1035 = vmatpush1.bf16.xpose.msra.mxu0 0
        %1036 = vmatprep.subr.bf16.mxu0 0
        %1037 = vmatpush1.bf16.xpose.msra.mxu0 0
        %1038 = vmatprep.subr.bf16.mxu0 0
        %1039 = vmatpush1.bf16.xpose.msra.mxu0 0
        %1040 = vmatprep.subr.bf16.mxu0 0
        %1041 = vmatpush1.bf16.xpose.msra.mxu0 0
        %1042 = vmatprep.subr.bf16.mxu0 0
        %1043 = vmatpush1.bf16.xpose.msra.mxu0 0
        %1044 = vmatprep.subr.bf16.mxu0 0
        %1045 = vmatpush1.bf16.xpose.msra.mxu0 0
        %1046 = vmatprep.subr.bf16.mxu0 0
        %1047 = vmatpush1.bf16.xpose.msra.mxu0 0
        %1048 = vmatprep.subr.bf16.mxu0 0
        %1049 = vmatpush1.bf16.xpose.msra.mxu0 0
        %1050 = vmatprep.mubr.bf16.mxu0 0
        %1051 = vmatmul.mubr.bf16.gmra.mrb[0].mxu0 %v1013
        %v1052 = vpop.f32.mrb[0].mxu0
        %v1053 = vadd.f32 0.0, %v1052
        %v1054 = vpop.f32.mrb[0].mxu0
        %v1055 = vpop.f32.mrb[0].mxu0
        %v1056 = vadd.f32 0.0, %v1055
        %v1057 = vpop.f32.mrb[0].mxu0
        %1058 = vdwg.mxu0
        %v1060 = vsel %vm964, %v915, 0
        %v1063 = vsel %vm964, %v931, 0
        %1065 = vmatprep.subr.bf16.mxu0 0
        %1066 = vmatpush1.bf16.xpose.msra.mxu0 %v1063
        %1067 = vmatprep.subr.bf16.mxu0 0
        %1068 = vmatpush1.bf16.xpose.msra.mxu0 0
        %1069 = vmatprep.subr.bf16.mxu0 0
        %1070 = vmatpush1.bf16.xpose.msra.mxu0 0
        %1071 = vmatprep.subr.bf16.mxu0 0
        %1072 = vmatpush1.bf16.xpose.msra.mxu0 0
        %1073 = vmatprep.subr.bf16.mxu0 0
        %1074 = vmatpush1.bf16.xpose.msra.mxu0 0
        %1075 = vmatprep.subr.bf16.mxu0 0
        %1076 = vmatpush1.bf16.xpose.msra.mxu0 0
        %1077 = vmatprep.subr.bf16.mxu0 0
        %1078 = vmatpush1.bf16.xpose.msra.mxu0 0
        %1079 = vmatprep.subr.bf16.mxu0 0
        %1080 = vmatpush1.bf16.xpose.msra.mxu0 0
        %1081 = vmatprep.subr.bf16.mxu0 0
        %1082 = vmatpush1.bf16.xpose.msra.mxu0 0
        %1083 = vmatprep.subr.bf16.mxu0 0
        %1084 = vmatpush1.bf16.xpose.msra.mxu0 0
        %1085 = vmatprep.subr.bf16.mxu0 0
        %1086 = vmatpush1.bf16.xpose.msra.mxu0 0
        %1087 = vmatprep.subr.bf16.mxu0 0
        %1088 = vmatpush1.bf16.xpose.msra.mxu0 0
        %1089 = vmatprep.subr.bf16.mxu0 0
        %1090 = vmatpush1.bf16.xpose.msra.mxu0 0
        %1091 = vmatprep.subr.bf16.mxu0 0
        %1092 = vmatpush1.bf16.xpose.msra.mxu0 0
        %1093 = vmatprep.subr.bf16.mxu0 0
        %1094 = vmatpush1.bf16.xpose.msra.mxu0 0
        %1095 = vmatprep.subr.bf16.mxu0 0
        %1096 = vmatpush1.bf16.xpose.msra.mxu0 0
        %1097 = vmatprep.mubr.bf16.mxu0 0
        %1098 = vmatmul.mubr.bf16.gmra.mrb[0].mxu0 %v1060
        %v1099 = vpop.f32.mrb[0].mxu0
        %v1100 = vadd.f32 0.0, %v1099
        %v1101 = vpop.f32.mrb[0].mxu0
        %v1102 = vpop.f32.mrb[0].mxu0
        %v1103 = vadd.f32 0.0, %v1102
        %v1104 = vpop.f32.mrb[0].mxu0
        %1105 = vdwg.mxu0
        %v1107 = vsel %vm964, %v917, 0
        %v1110 = vsel %vm964, %v933, 0
        %1112 = vmatprep.subr.bf16.mxu0 0
        %1113 = vmatpush1.bf16.xpose.msra.mxu0 %v1110
        %1114 = vmatprep.subr.bf16.mxu0 0
        %1115 = vmatpush1.bf16.xpose.msra.mxu0 0
        %1116 = vmatprep.subr.bf16.mxu0 0
        %1117 = vmatpush1.bf16.xpose.msra.mxu0 0
        %1118 = vmatprep.subr.bf16.mxu0 0
        %1119 = vmatpush1.bf16.xpose.msra.mxu0 0
        %1120 = vmatprep.subr.bf16.mxu0 0
        %1121 = vmatpush1.bf16.xpose.msra.mxu0 0
        %1122 = vmatprep.subr.bf16.mxu0 0
        %1123 = vmatpush1.bf16.xpose.msra.mxu0 0
        %1124 = vmatprep.subr.bf16.mxu0 0
        %1125 = vmatpush1.bf16.xpose.msra.mxu0 0
        %1126 = vmatprep.subr.bf16.mxu0 0
        %1127 = vmatpush1.bf16.xpose.msra.mxu0 0
        %1128 = vmatprep.subr.bf16.mxu0 0
        %1129 = vmatpush1.bf16.xpose.msra.mxu0 0
        %1130 = vmatprep.subr.bf16.mxu0 0
        %1131 = vmatpush1.bf16.xpose.msra.mxu0 0
        %1132 = vmatprep.subr.bf16.mxu0 0
        %1133 = vmatpush1.bf16.xpose.msra.mxu0 0
        %1134 = vmatprep.subr.bf16.mxu0 0
        %1135 = vmatpush1.bf16.xpose.msra.mxu0 0
        %1136 = vmatprep.subr.bf16.mxu0 0
        %1137 = vmatpush1.bf16.xpose.msra.mxu0 0
        %1138 = vmatprep.subr.bf16.mxu0 0
        %1139 = vmatpush1.bf16.xpose.msra.mxu0 0
        %1140 = vmatprep.subr.bf16.mxu0 0
        %1141 = vmatpush1.bf16.xpose.msra.mxu0 0
        %1142 = vmatprep.subr.bf16.mxu0 0
        %1143 = vmatpush1.bf16.xpose.msra.mxu0 0
        %1144 = vmatprep.mubr.bf16.mxu0 0
        %1145 = vmatmul.mubr.bf16.gmra.mrb[0].mxu0 %v1107
        %v1146 = vpop.f32.mrb[0].mxu0
        %v1147 = vadd.f32 0.0, %v1146
        %v1148 = vpop.f32.mrb[0].mxu0
        %v1149 = vpop.f32.mrb[0].mxu0
        %v1150 = vadd.f32 0.0, %v1149
        %v1151 = vpop.f32.mrb[0].mxu0
        %1152 = vdwg.mxu0
        %v1154 = vsel %vm964, %v919, 0
        %v1157 = vsel %vm964, %v935, 0
        %1159 = vmatprep.subr.bf16.mxu0 0
        %1160 = vmatpush1.bf16.xpose.msra.mxu0 %v1157
        %1161 = vmatprep.subr.bf16.mxu0 0
        %1162 = vmatpush1.bf16.xpose.msra.mxu0 0
        %1163 = vmatprep.subr.bf16.mxu0 0
        %1164 = vmatpush1.bf16.xpose.msra.mxu0 0
        %1165 = vmatprep.subr.bf16.mxu0 0
        %1166 = vmatpush1.bf16.xpose.msra.mxu0 0
        %1167 = vmatprep.subr.bf16.mxu0 0
        %1168 = vmatpush1.bf16.xpose.msra.mxu0 0
        %1169 = vmatprep.subr.bf16.mxu0 0
        %1170 = vmatpush1.bf16.xpose.msra.mxu0 0
        %1171 = vmatprep.subr.bf16.mxu0 0
        %1172 = vmatpush1.bf16.xpose.msra.mxu0 0
        %1173 = vmatprep.subr.bf16.mxu0 0
        %1174 = vmatpush1.bf16.xpose.msra.mxu0 0
        %1175 = vmatprep.subr.bf16.mxu0 0
        %1176 = vmatpush1.bf16.xpose.msra.mxu0 0
        %1177 = vmatprep.subr.bf16.mxu0 0
        %1178 = vmatpush1.bf16.xpose.msra.mxu0 0
        %1179 = vmatprep.subr.bf16.mxu0 0
        %1180 = vmatpush1.bf16.xpose.msra.mxu0 0
        %1181 = vmatprep.subr.bf16.mxu0 0
        %1182 = vmatpush1.bf16.xpose.msra.mxu0 0
        %1183 = vmatprep.subr.bf16.mxu0 0
        %1184 = vmatpush1.bf16.xpose.msra.mxu0 0
        %1185 = vmatprep.subr.bf16.mxu0 0
        %1186 = vmatpush1.bf16.xpose.msra.mxu0 0
        %1187 = vmatprep.subr.bf16.mxu0 0
        %1188 = vmatpush1.bf16.xpose.msra.mxu0 0
        %1189 = vmatprep.subr.bf16.mxu0 0
        %1190 = vmatpush1.bf16.xpose.msra.mxu0 0
        %1191 = vmatprep.mubr.bf16.mxu0 0
        %1192 = vmatmul.mubr.bf16.gmra.mrb[0].mxu0 %v1154
        %v1193 = vpop.f32.mrb[0].mxu0
        %v1194 = vadd.f32 0.0, %v1193
        %v1195 = vpop.f32.mrb[0].mxu0
        %v1196 = vpop.f32.mrb[0].mxu0
        %v1197 = vadd.f32 0.0, %v1196
        %v1198 = vpop.f32.mrb[0].mxu0
        %1199 = vdwg.mxu0
        %v1201 = vsel %vm964, %v921, 0
        %v1204 = vsel %vm964, %v937, 0
        %1206 = vmatprep.subr.bf16.mxu0 0
        %1207 = vmatpush1.bf16.xpose.msra.mxu0 %v1204
        %1208 = vmatprep.subr.bf16.mxu0 0
        %1209 = vmatpush1.bf16.xpose.msra.mxu0 0
        %1210 = vmatprep.subr.bf16.mxu0 0
        %1211 = vmatpush1.bf16.xpose.msra.mxu0 0
        %1212 = vmatprep.subr.bf16.mxu0 0
        %1213 = vmatpush1.bf16.xpose.msra.mxu0 0
        %1214 = vmatprep.subr.bf16.mxu0 0
        %1215 = vmatpush1.bf16.xpose.msra.mxu0 0
        %1216 = vmatprep.subr.bf16.mxu0 0
        %1217 = vmatpush1.bf16.xpose.msra.mxu0 0
        %1218 = vmatprep.subr.bf16.mxu0 0
        %1219 = vmatpush1.bf16.xpose.msra.mxu0 0
        %1220 = vmatprep.subr.bf16.mxu0 0
        %1221 = vmatpush1.bf16.xpose.msra.mxu0 0
        %1222 = vmatprep.subr.bf16.mxu0 0
        %1223 = vmatpush1.bf16.xpose.msra.mxu0 0
        %1224 = vmatprep.subr.bf16.mxu0 0
        %1225 = vmatpush1.bf16.xpose.msra.mxu0 0
        %1226 = vmatprep.subr.bf16.mxu0 0
        %1227 = vmatpush1.bf16.xpose.msra.mxu0 0
        %1228 = vmatprep.subr.bf16.mxu0 0
        %1229 = vmatpush1.bf16.xpose.msra.mxu0 0
        %1230 = vmatprep.subr.bf16.mxu0 0
        %1231 = vmatpush1.bf16.xpose.msra.mxu0 0
        %1232 = vmatprep.subr.bf16.mxu0 0
        %1233 = vmatpush1.bf16.xpose.msra.mxu0 0
        %1234 = vmatprep.subr.bf16.mxu0 0
        %1235 = vmatpush1.bf16.xpose.msra.mxu0 0
        %1236 = vmatprep.subr.bf16.mxu0 0
        %1237 = vmatpush1.bf16.xpose.msra.mxu0 0
        %1238 = vmatprep.mubr.bf16.mxu0 0
        %1239 = vmatmul.mubr.bf16.gmra.mrb[0].mxu0 %v1201
        %v1240 = vpop.f32.mrb[0].mxu0
        %v1241 = vadd.f32 0.0, %v1240
        %v1242 = vpop.f32.mrb[0].mxu0
        %v1243 = vpop.f32.mrb[0].mxu0
        %v1244 = vadd.f32 0.0, %v1243
        %v1245 = vpop.f32.mrb[0].mxu0
        %1246 = vdwg.mxu0
        %v1248 = vsel %vm964, %v923, 0
        %v1251 = vsel %vm964, %v939, 0
        %1253 = vmatprep.subr.bf16.mxu0 0
        %1254 = vmatpush1.bf16.xpose.msra.mxu0 %v1251
        %1255 = vmatprep.subr.bf16.mxu0 0
        %1256 = vmatpush1.bf16.xpose.msra.mxu0 0
        %1257 = vmatprep.subr.bf16.mxu0 0
        %1258 = vmatpush1.bf16.xpose.msra.mxu0 0
        %1259 = vmatprep.subr.bf16.mxu0 0
        %1260 = vmatpush1.bf16.xpose.msra.mxu0 0
        %1261 = vmatprep.subr.bf16.mxu0 0
        %1262 = vmatpush1.bf16.xpose.msra.mxu0 0
        %1263 = vmatprep.subr.bf16.mxu0 0
        %1264 = vmatpush1.bf16.xpose.msra.mxu0 0
        %1265 = vmatprep.subr.bf16.mxu0 0
        %1266 = vmatpush1.bf16.xpose.msra.mxu0 0
        %1267 = vmatprep.subr.bf16.mxu0 0
        %1268 = vmatpush1.bf16.xpose.msra.mxu0 0
        %1269 = vmatprep.subr.bf16.mxu0 0
        %1270 = vmatpush1.bf16.xpose.msra.mxu0 0
        %1271 = vmatprep.subr.bf16.mxu0 0
        %1272 = vmatpush1.bf16.xpose.msra.mxu0 0
        %1273 = vmatprep.subr.bf16.mxu0 0
        %1274 = vmatpush1.bf16.xpose.msra.mxu0 0
        %1275 = vmatprep.subr.bf16.mxu0 0
        %1276 = vmatpush1.bf16.xpose.msra.mxu0 0
        %1277 = vmatprep.subr.bf16.mxu0 0
        %1278 = vmatpush1.bf16.xpose.msra.mxu0 0
        %1279 = vmatprep.subr.bf16.mxu0 0
        %1280 = vmatpush1.bf16.xpose.msra.mxu0 0
        %1281 = vmatprep.subr.bf16.mxu0 0
        %1282 = vmatpush1.bf16.xpose.msra.mxu0 0
        %1283 = vmatprep.subr.bf16.mxu0 0
        %1284 = vmatpush1.bf16.xpose.msra.mxu0 0
        %1285 = vmatprep.mubr.bf16.mxu0 0
        %1286 = vmatmul.mubr.bf16.gmra.mrb[0].mxu0 %v1248
        %v1287 = vpop.f32.mrb[0].mxu0
        %v1288 = vadd.f32 0.0, %v1287
        %v1289 = vpop.f32.mrb[0].mxu0
        %v1290 = vpop.f32.mrb[0].mxu0
        %v1291 = vadd.f32 0.0, %v1290
        %v1292 = vpop.f32.mrb[0].mxu0
        %1293 = vdwg.mxu0
        %v1295 = vsel %vm964, %v925, 0
        %v1298 = vsel %vm964, %v941, 0
        %1300 = vmatprep.subr.bf16.mxu0 0
        %1301 = vmatpush1.bf16.xpose.msra.mxu0 %v1298
        %1302 = vmatprep.subr.bf16.mxu0 0
        %1303 = vmatpush1.bf16.xpose.msra.mxu0 0
        %1304 = vmatprep.subr.bf16.mxu0 0
        %1305 = vmatpush1.bf16.xpose.msra.mxu0 0
        %1306 = vmatprep.subr.bf16.mxu0 0
        %1307 = vmatpush1.bf16.xpose.msra.mxu0 0
        %1308 = vmatprep.subr.bf16.mxu0 0
        %1309 = vmatpush1.bf16.xpose.msra.mxu0 0
        %1310 = vmatprep.subr.bf16.mxu0 0
        %1311 = vmatpush1.bf16.xpose.msra.mxu0 0
        %1312 = vmatprep.subr.bf16.mxu0 0
        %1313 = vmatpush1.bf16.xpose.msra.mxu0 0
        %1314 = vmatprep.subr.bf16.mxu0 0
        %1315 = vmatpush1.bf16.xpose.msra.mxu0 0
        %1316 = vmatprep.subr.bf16.mxu0 0
        %1317 = vmatpush1.bf16.xpose.msra.mxu0 0
        %1318 = vmatprep.subr.bf16.mxu0 0
        %1319 = vmatpush1.bf16.xpose.msra.mxu0 0
        %1320 = vmatprep.subr.bf16.mxu0 0
        %1321 = vmatpush1.bf16.xpose.msra.mxu0 0
        %1322 = vmatprep.subr.bf16.mxu0 0
        %1323 = vmatpush1.bf16.xpose.msra.mxu0 0
        %1324 = vmatprep.subr.bf16.mxu0 0
        %1325 = vmatpush1.bf16.xpose.msra.mxu0 0
        %1326 = vmatprep.subr.bf16.mxu0 0
        %1327 = vmatpush1.bf16.xpose.msra.mxu0 0
        %1328 = vmatprep.subr.bf16.mxu0 0
        %1329 = vmatpush1.bf16.xpose.msra.mxu0 0
        %1330 = vmatprep.subr.bf16.mxu0 0
        %1331 = vmatpush1.bf16.xpose.msra.mxu0 0
        %1332 = vmatprep.mubr.bf16.mxu0 0
        %1333 = vmatmul.mubr.bf16.gmra.mrb[0].mxu0 %v1295
        %v1334 = vpop.f32.mrb[0].mxu0
        %v1335 = vadd.f32 0.0, %v1334
        %v1336 = vpop.f32.mrb[0].mxu0
        %v1337 = vpop.f32.mrb[0].mxu0
        %v1338 = vadd.f32 0.0, %v1337
        %v1339 = vpop.f32.mrb[0].mxu0
        %1340 = vdwg.mxu0
        %vm1341 = vcmask 130048
        %v1342 = vsel %vm1341, %v1006, -inf
        %1343 = vmax.xlane.f32.xlu0 %v1342
        %v1344 = vpop.xlane.xlu0 %1343
        %v1345 = vsel %vm1341, %v1009, -inf
        %1346 = vmax.xlane.f32.xlu0 %v1345
        %v1347 = vpop.xlane.xlu0 %1346
        %v1348 = vsel %vm1341, %v1053, -inf
        %1349 = vmax.xlane.f32.xlu0 %v1348
        %v1350 = vpop.xlane.xlu0 %1349
        %v1351 = vsel %vm1341, %v1056, -inf
        %1352 = vmax.xlane.f32.xlu0 %v1351
        %v1353 = vpop.xlane.xlu0 %1352
        %v1354 = vsel %vm1341, %v1100, -inf
        %1355 = vmax.xlane.f32.xlu0 %v1354
        %v1356 = vpop.xlane.xlu0 %1355
        %v1357 = vsel %vm1341, %v1103, -inf
        %1358 = vmax.xlane.f32.xlu0 %v1357
        %v1359 = vpop.xlane.xlu0 %1358
        %v1360 = vsel %vm1341, %v1147, -inf
        %1361 = vmax.xlane.f32.xlu0 %v1360
        %v1362 = vpop.xlane.xlu0 %1361
        %v1363 = vsel %vm1341, %v1150, -inf
        %1364 = vmax.xlane.f32.xlu0 %v1363
        %v1365 = vpop.xlane.xlu0 %1364
        %v1366 = vsel %vm1341, %v1194, -inf
        %1367 = vmax.xlane.f32.xlu0 %v1366
        %v1368 = vpop.xlane.xlu0 %1367
        %v1369 = vsel %vm1341, %v1197, -inf
        %1370 = vmax.xlane.f32.xlu0 %v1369
        %v1371 = vpop.xlane.xlu0 %1370
        %v1372 = vsel %vm1341, %v1241, -inf
        %1373 = vmax.xlane.f32.xlu0 %v1372
        %v1374 = vpop.xlane.xlu0 %1373
        %v1375 = vsel %vm1341, %v1244, -inf
        %1376 = vmax.xlane.f32.xlu0 %v1375
        %v1377 = vpop.xlane.xlu0 %1376
        %v1378 = vsel %vm1341, %v1288, -inf
        %1379 = vmax.xlane.f32.xlu0 %v1378
        %v1380 = vpop.xlane.xlu0 %1379
        %v1381 = vsel %vm1341, %v1291, -inf
        %1382 = vmax.xlane.f32.xlu0 %v1381
        %v1383 = vpop.xlane.xlu0 %1382
        %v1384 = vsel %vm1341, %v1335, -inf
        %1385 = vmax.xlane.f32.xlu0 %v1384
        %v1386 = vpop.xlane.xlu0 %1385
        %v1387 = vsel %vm1341, %v1338, -inf
        %1388 = vmax.xlane.f32.xlu0 %v1387
        %v1389 = vpop.xlane.xlu0 %1388
        %v1390 = vsub.f32 %v1006, %v1344
        %v1391 = vsub.f32 %v1009, %v1347
        %v1392 = vsub.f32 %v1053, %v1350
        %v1393 = vsub.f32 %v1056, %v1353
        %v1394 = vsub.f32 %v1100, %v1356
        %v1395 = vsub.f32 %v1103, %v1359
        %v1396 = vsub.f32 %v1147, %v1362
        %v1397 = vsub.f32 %v1150, %v1365
        %v1398 = vsub.f32 %v1194, %v1368
        %v1399 = vsub.f32 %v1197, %v1371
        %v1400 = vsub.f32 %v1241, %v1374
        %v1401 = vsub.f32 %v1244, %v1377
        %v1402 = vsub.f32 %v1288, %v1380
        %v1403 = vsub.f32 %v1291, %v1383
        %v1404 = vsub.f32 %v1335, %v1386
        %v1405 = vsub.f32 %v1338, %v1389
        %v1406 = vmul.f32 %v1390, 1.442695
        %v1407 = vpow.pop %v1406
        %v1408 = vmul.f32 %v1391, 1.442695
        %v1409 = vpow.pop %v1408
        %v1410 = vmul.f32 %v1392, 1.442695
        %v1411 = vpow.pop %v1410
        %v1412 = vmul.f32 %v1393, 1.442695
        %v1413 = vpow.pop %v1412
        %v1414 = vmul.f32 %v1394, 1.442695
        %v1415 = vpow.pop %v1414
        %v1416 = vmul.f32 %v1395, 1.442695
        %v1417 = vpow.pop %v1416
        %v1418 = vmul.f32 %v1396, 1.442695
        %v1419 = vpow.pop %v1418
        %v1420 = vmul.f32 %v1397, 1.442695
        %v1421 = vpow.pop %v1420
        %v1422 = vmul.f32 %v1398, 1.442695
        %v1423 = vpow.pop %v1422
        %v1424 = vmul.f32 %v1399, 1.442695
        %v1425 = vpow.pop %v1424
        %v1426 = vmul.f32 %v1400, 1.442695
        %v1427 = vpow.pop %v1426
        %v1428 = vmul.f32 %v1401, 1.442695
        %v1429 = vpow.pop %v1428
        %v1430 = vmul.f32 %v1402, 1.442695
        %v1431 = vpow.pop %v1430
        %v1432 = vmul.f32 %v1403, 1.442695
        %v1433 = vpow.pop %v1432
        %v1434 = vmul.f32 %v1404, 1.442695
        %v1435 = vpow.pop %v1434
        %v1436 = vmul.f32 %v1405, 1.442695
        %v1437 = vpow.pop %v1436
        %v1438 = vsel %vm1341, %v1407, 0.0
        %1439 = vadd.xlane.f32.xlu0 %v1438
        %v1440 = vpop.xlane.xlu0 %1439
        %v1441 = vsel %vm1341, %v1409, 0.0
        %1442 = vadd.xlane.f32.xlu0 %v1441
        %v1443 = vpop.xlane.xlu0 %1442
        %v1444 = vsel %vm1341, %v1411, 0.0
        %1445 = vadd.xlane.f32.xlu0 %v1444
        %v1446 = vpop.xlane.xlu0 %1445
        %v1447 = vsel %vm1341, %v1413, 0.0
        %1448 = vadd.xlane.f32.xlu0 %v1447
        %v1449 = vpop.xlane.xlu0 %1448
        %v1450 = vsel %vm1341, %v1415, 0.0
        %1451 = vadd.xlane.f32.xlu0 %v1450
        %v1452 = vpop.xlane.xlu0 %1451
        %v1453 = vsel %vm1341, %v1417, 0.0
        %1454 = vadd.xlane.f32.xlu0 %v1453
        %v1455 = vpop.xlane.xlu0 %1454
        %v1456 = vsel %vm1341, %v1419, 0.0
        %1457 = vadd.xlane.f32.xlu0 %v1456
        %v1458 = vpop.xlane.xlu0 %1457
        %v1459 = vsel %vm1341, %v1421, 0.0
        %1460 = vadd.xlane.f32.xlu0 %v1459
        %v1461 = vpop.xlane.xlu0 %1460
        %v1462 = vsel %vm1341, %v1423, 0.0
        %1463 = vadd.xlane.f32.xlu0 %v1462
        %v1464 = vpop.xlane.xlu0 %1463
        %v1465 = vsel %vm1341, %v1425, 0.0
        %1466 = vadd.xlane.f32.xlu0 %v1465
        %v1467 = vpop.xlane.xlu0 %1466
        %v1468 = vsel %vm1341, %v1427, 0.0
        %1469 = vadd.xlane.f32.xlu0 %v1468
        %v1470 = vpop.xlane.xlu0 %1469
        %v1471 = vsel %vm1341, %v1429, 0.0
        %1472 = vadd.xlane.f32.xlu0 %v1471
        %v1473 = vpop.xlane.xlu0 %1472
        %v1474 = vsel %vm1341, %v1431, 0.0
        %1475 = vadd.xlane.f32.xlu0 %v1474
        %v1476 = vpop.xlane.xlu0 %1475
        %v1477 = vsel %vm1341, %v1433, 0.0
        %1478 = vadd.xlane.f32.xlu0 %v1477
        %v1479 = vpop.xlane.xlu0 %1478
        %v1480 = vsel %vm1341, %v1435, 0.0
        %1481 = vadd.xlane.f32.xlu0 %v1480
        %v1482 = vpop.xlane.xlu0 %1481
        %v1483 = vsel %vm1341, %v1437, 0.0
        %1484 = vadd.xlane.f32.xlu0 %v1483
        %v1485 = vpop.xlane.xlu0 %1484
        %v1486 = vrcp.pop %v1440
        %v1487 = vrcp.pop %v1443
        %v1488 = vrcp.pop %v1446
        %v1489 = vrcp.pop %v1449
        %v1490 = vrcp.pop %v1452
        %v1491 = vrcp.pop %v1455
        %v1492 = vrcp.pop %v1458
        %v1493 = vrcp.pop %v1461
        %v1494 = vrcp.pop %v1464
        %v1495 = vrcp.pop %v1467
        %v1496 = vrcp.pop %v1470
        %v1497 = vrcp.pop %v1473
        %v1498 = vrcp.pop %v1476
        %v1499 = vrcp.pop %v1479
        %v1500 = vrcp.pop %v1482
        %v1501 = vrcp.pop %v1485
        %v1502 = vmul.f32 %v1407, %v1486
        %v1503 = vmul.f32 %v1409, %v1487
        %v1504 = vmul.f32 %v1411, %v1488
        %v1505 = vmul.f32 %v1413, %v1489
        %v1506 = vmul.f32 %v1415, %v1490
        %v1507 = vmul.f32 %v1417, %v1491
        %v1508 = vmul.f32 %v1419, %v1492
        %v1509 = vmul.f32 %v1421, %v1493
        %v1510 = vmul.f32 %v1423, %v1494
        %v1511 = vmul.f32 %v1425, %v1495
        %v1512 = vmul.f32 %v1427, %v1496
        %v1513 = vmul.f32 %v1429, %v1497
        %v1514 = vmul.f32 %v1431, %v1498
        %v1515 = vmul.f32 %v1433, %v1499
        %v1516 = vmul.f32 %v1435, %v1500
        %v1517 = vmul.f32 %v1437, %v1501
        %v1518 = vpack.c.bf16 %v1503, %v1502
        %v1519 = vpack.c.bf16 %v1505, %v1504
        %v1520 = vpack.c.bf16 %v1507, %v1506
        %v1521 = vpack.c.bf16 %v1509, %v1508
        %v1522 = vpack.c.bf16 %v1511, %v1510
        %v1523 = vpack.c.bf16 %v1513, %v1512
        %v1524 = vpack.c.bf16 %v1515, %v1514
        %v1525 = vpack.c.bf16 %v1517, %v1516
        %v1527 = vsel %vm1341, %v1518, 0
        %1529 = vmatprep.subr.bf16.mxu0 0
        %1530 = vmatpush1.bf16.msra.mxu0 %v942
        %1531 = vmatprep.subr.bf16.mxu0 0
        %1532 = vmatpush1.bf16.msra.mxu0 0
        %1533 = vmatprep.subr.bf16.mxu0 0
        %1534 = vmatpush1.bf16.msra.mxu0 0
        %1535 = vmatprep.subr.bf16.mxu0 0
        %1536 = vmatpush1.bf16.msra.mxu0 0
        %1537 = vmatprep.subr.bf16.mxu0 0
        %1538 = vmatpush1.bf16.msra.mxu0 0
        %1539 = vmatprep.subr.bf16.mxu0 0
        %1540 = vmatpush1.bf16.msra.mxu0 0
        %1541 = vmatprep.subr.bf16.mxu0 0
        %1542 = vmatpush1.bf16.msra.mxu0 0
        %1543 = vmatprep.subr.bf16.mxu0 0
        %1544 = vmatpush1.bf16.msra.mxu0 0
        %1545 = vmatprep.subr.bf16.mxu0 0
        %1546 = vmatpush1.bf16.msra.mxu0 0
        %1547 = vmatprep.subr.bf16.mxu0 0
        %1548 = vmatpush1.bf16.msra.mxu0 0
        %1549 = vmatprep.subr.bf16.mxu0 0
        %1550 = vmatpush1.bf16.msra.mxu0 0
        %1551 = vmatprep.subr.bf16.mxu0 0
        %1552 = vmatpush1.bf16.msra.mxu0 0
        %1553 = vmatprep.subr.bf16.mxu0 0
        %1554 = vmatpush1.bf16.msra.mxu0 0
        %1555 = vmatprep.subr.bf16.mxu0 0
        %1556 = vmatpush1.bf16.msra.mxu0 0
        %1557 = vmatprep.subr.bf16.mxu0 0
        %1558 = vmatpush1.bf16.msra.mxu0 0
        %1559 = vmatprep.subr.bf16.mxu0 0
        %1560 = vmatpush1.bf16.msra.mxu0 0
        %1561 = vmatprep.mubr.bf16.mxu0 0
        %1562 = vmatmul.mubr.bf16.gmra.mrb[0].mxu0 %v1527
        %v1563 = vpop.f32.mrb[0].mxu0
        %v1564 = vadd.f32 0.0, %v1563
        %v1565 = vpop.f32.mrb[0].mxu0
        %v1566 = vpop.f32.mrb[0].mxu0
        %v1567 = vadd.f32 0.0, %v1566
        %v1568 = vpop.f32.mrb[0].mxu0
        %1569 = vdwg.mxu0
        %v1571 = vsel %vm1341, %v1519, 0
        %1573 = vmatprep.subr.bf16.mxu0 0
        %1574 = vmatpush1.bf16.msra.mxu0 %v943
        %1575 = vmatprep.subr.bf16.mxu0 0
        %1576 = vmatpush1.bf16.msra.mxu0 0
        %1577 = vmatprep.subr.bf16.mxu0 0
        %1578 = vmatpush1.bf16.msra.mxu0 0
        %1579 = vmatprep.subr.bf16.mxu0 0
        %1580 = vmatpush1.bf16.msra.mxu0 0
        %1581 = vmatprep.subr.bf16.mxu0 0
        %1582 = vmatpush1.bf16.msra.mxu0 0
        %1583 = vmatprep.subr.bf16.mxu0 0
        %1584 = vmatpush1.bf16.msra.mxu0 0
        %1585 = vmatprep.subr.bf16.mxu0 0
        %1586 = vmatpush1.bf16.msra.mxu0 0
        %1587 = vmatprep.subr.bf16.mxu0 0
        %1588 = vmatpush1.bf16.msra.mxu0 0
        %1589 = vmatprep.subr.bf16.mxu0 0
        %1590 = vmatpush1.bf16.msra.mxu0 0
        %1591 = vmatprep.subr.bf16.mxu0 0
        %1592 = vmatpush1.bf16.msra.mxu0 0
        %1593 = vmatprep.subr.bf16.mxu0 0
        %1594 = vmatpush1.bf16.msra.mxu0 0
        %1595 = vmatprep.subr.bf16.mxu0 0
        %1596 = vmatpush1.bf16.msra.mxu0 0
        %1597 = vmatprep.subr.bf16.mxu0 0
        %1598 = vmatpush1.bf16.msra.mxu0 0
        %1599 = vmatprep.subr.bf16.mxu0 0
        %1600 = vmatpush1.bf16.msra.mxu0 0
        %1601 = vmatprep.subr.bf16.mxu0 0
        %1602 = vmatpush1.bf16.msra.mxu0 0
        %1603 = vmatprep.subr.bf16.mxu0 0
        %1604 = vmatpush1.bf16.msra.mxu0 0
        %1605 = vmatprep.mubr.bf16.mxu0 0
        %1606 = vmatmul.mubr.bf16.gmra.mrb[0].mxu0 %v1571
        %v1607 = vpop.f32.mrb[0].mxu0
        %v1608 = vadd.f32 0.0, %v1607
        %v1609 = vpop.f32.mrb[0].mxu0
        %v1610 = vpop.f32.mrb[0].mxu0
        %v1611 = vadd.f32 0.0, %v1610
        %v1612 = vpop.f32.mrb[0].mxu0
        %1613 = vdwg.mxu0
        %v1615 = vsel %vm1341, %v1520, 0
        %1617 = vmatprep.subr.bf16.mxu0 0
        %1618 = vmatpush1.bf16.msra.mxu0 %v947
        %1619 = vmatprep.subr.bf16.mxu0 0
        %1620 = vmatpush1.bf16.msra.mxu0 0
        %1621 = vmatprep.subr.bf16.mxu0 0
        %1622 = vmatpush1.bf16.msra.mxu0 0
        %1623 = vmatprep.subr.bf16.mxu0 0
        %1624 = vmatpush1.bf16.msra.mxu0 0
        %1625 = vmatprep.subr.bf16.mxu0 0
        %1626 = vmatpush1.bf16.msra.mxu0 0
        %1627 = vmatprep.subr.bf16.mxu0 0
        %1628 = vmatpush1.bf16.msra.mxu0 0
        %1629 = vmatprep.subr.bf16.mxu0 0
        %1630 = vmatpush1.bf16.msra.mxu0 0
        %1631 = vmatprep.subr.bf16.mxu0 0
        %1632 = vmatpush1.bf16.msra.mxu0 0
        %1633 = vmatprep.subr.bf16.mxu0 0
        %1634 = vmatpush1.bf16.msra.mxu0 0
        %1635 = vmatprep.subr.bf16.mxu0 0
        %1636 = vmatpush1.bf16.msra.mxu0 0
        %1637 = vmatprep.subr.bf16.mxu0 0
        %1638 = vmatpush1.bf16.msra.mxu0 0
        %1639 = vmatprep.subr.bf16.mxu0 0
        %1640 = vmatpush1.bf16.msra.mxu0 0
        %1641 = vmatprep.subr.bf16.mxu0 0
        %1642 = vmatpush1.bf16.msra.mxu0 0
        %1643 = vmatprep.subr.bf16.mxu0 0
        %1644 = vmatpush1.bf16.msra.mxu0 0
        %1645 = vmatprep.subr.bf16.mxu0 0
        %1646 = vmatpush1.bf16.msra.mxu0 0
        %1647 = vmatprep.subr.bf16.mxu0 0
        %1648 = vmatpush1.bf16.msra.mxu0 0
        %1649 = vmatprep.mubr.bf16.mxu0 0
        %1650 = vmatmul.mubr.bf16.gmra.mrb[0].mxu0 %v1615
        %v1651 = vpop.f32.mrb[0].mxu0
        %v1652 = vadd.f32 0.0, %v1651
        %v1653 = vpop.f32.mrb[0].mxu0
        %v1654 = vpop.f32.mrb[0].mxu0
        %v1655 = vadd.f32 0.0, %v1654
        %v1656 = vpop.f32.mrb[0].mxu0
        %1657 = vdwg.mxu0
        %v1659 = vsel %vm1341, %v1521, 0
        %1661 = vmatprep.subr.bf16.mxu0 0
        %1662 = vmatpush1.bf16.msra.mxu0 %v949
        %1663 = vmatprep.subr.bf16.mxu0 0
        %1664 = vmatpush1.bf16.msra.mxu0 0
        %1665 = vmatprep.subr.bf16.mxu0 0
        %1666 = vmatpush1.bf16.msra.mxu0 0
        %1667 = vmatprep.subr.bf16.mxu0 0
        %1668 = vmatpush1.bf16.msra.mxu0 0
        %1669 = vmatprep.subr.bf16.mxu0 0
        %1670 = vmatpush1.bf16.msra.mxu0 0
        %1671 = vmatprep.subr.bf16.mxu0 0
        %1672 = vmatpush1.bf16.msra.mxu0 0
        %1673 = vmatprep.subr.bf16.mxu0 0
        %1674 = vmatpush1.bf16.msra.mxu0 0
        %1675 = vmatprep.subr.bf16.mxu0 0
        %1676 = vmatpush1.bf16.msra.mxu0 0
        %1677 = vmatprep.subr.bf16.mxu0 0
        %1678 = vmatpush1.bf16.msra.mxu0 0
        %1679 = vmatprep.subr.bf16.mxu0 0
        %1680 = vmatpush1.bf16.msra.mxu0 0
        %1681 = vmatprep.subr.bf16.mxu0 0
        %1682 = vmatpush1.bf16.msra.mxu0 0
        %1683 = vmatprep.subr.bf16.mxu0 0
        %1684 = vmatpush1.bf16.msra.mxu0 0
        %1685 = vmatprep.subr.bf16.mxu0 0
        %1686 = vmatpush1.bf16.msra.mxu0 0
        %1687 = vmatprep.subr.bf16.mxu0 0
        %1688 = vmatpush1.bf16.msra.mxu0 0
        %1689 = vmatprep.subr.bf16.mxu0 0
        %1690 = vmatpush1.bf16.msra.mxu0 0
        %1691 = vmatprep.subr.bf16.mxu0 0
        %1692 = vmatpush1.bf16.msra.mxu0 0
        %1693 = vmatprep.mubr.bf16.mxu0 0
        %1694 = vmatmul.mubr.bf16.gmra.mrb[0].mxu0 %v1659
        %v1695 = vpop.f32.mrb[0].mxu0
        %v1696 = vadd.f32 0.0, %v1695
        %v1697 = vpop.f32.mrb[0].mxu0
        %v1698 = vpop.f32.mrb[0].mxu0
        %v1699 = vadd.f32 0.0, %v1698
        %v1700 = vpop.f32.mrb[0].mxu0
        %1701 = vdwg.mxu0
        %v1703 = vsel %vm1341, %v1522, 0
        %1705 = vmatprep.subr.bf16.mxu0 0
        %1706 = vmatpush1.bf16.msra.mxu0 %v953
        %1707 = vmatprep.subr.bf16.mxu0 0
        %1708 = vmatpush1.bf16.msra.mxu0 0
        %1709 = vmatprep.subr.bf16.mxu0 0
        %1710 = vmatpush1.bf16.msra.mxu0 0
        %1711 = vmatprep.subr.bf16.mxu0 0
        %1712 = vmatpush1.bf16.msra.mxu0 0
        %1713 = vmatprep.subr.bf16.mxu0 0
        %1714 = vmatpush1.bf16.msra.mxu0 0
        %1715 = vmatprep.subr.bf16.mxu0 0
        %1716 = vmatpush1.bf16.msra.mxu0 0
        %1717 = vmatprep.subr.bf16.mxu0 0
        %1718 = vmatpush1.bf16.msra.mxu0 0
        %1719 = vmatprep.subr.bf16.mxu0 0
        %1720 = vmatpush1.bf16.msra.mxu0 0
        %1721 = vmatprep.subr.bf16.mxu0 0
        %1722 = vmatpush1.bf16.msra.mxu0 0
        %1723 = vmatprep.subr.bf16.mxu0 0
        %1724 = vmatpush1.bf16.msra.mxu0 0
        %1725 = vmatprep.subr.bf16.mxu0 0
        %1726 = vmatpush1.bf16.msra.mxu0 0
        %1727 = vmatprep.subr.bf16.mxu0 0
        %1728 = vmatpush1.bf16.msra.mxu0 0
        %1729 = vmatprep.subr.bf16.mxu0 0
        %1730 = vmatpush1.bf16.msra.mxu0 0
        %1731 = vmatprep.subr.bf16.mxu0 0
        %1732 = vmatpush1.bf16.msra.mxu0 0
        %1733 = vmatprep.subr.bf16.mxu0 0
        %1734 = vmatpush1.bf16.msra.mxu0 0
        %1735 = vmatprep.subr.bf16.mxu0 0
        %1736 = vmatpush1.bf16.msra.mxu0 0
        %1737 = vmatprep.mubr.bf16.mxu0 0
        %1738 = vmatmul.mubr.bf16.gmra.mrb[0].mxu0 %v1703
        %v1739 = vpop.f32.mrb[0].mxu0
        %v1740 = vadd.f32 0.0, %v1739
        %v1741 = vpop.f32.mrb[0].mxu0
        %v1742 = vpop.f32.mrb[0].mxu0
        %v1743 = vadd.f32 0.0, %v1742
        %v1744 = vpop.f32.mrb[0].mxu0
        %1745 = vdwg.mxu0
        %v1747 = vsel %vm1341, %v1523, 0
        %1749 = vmatprep.subr.bf16.mxu0 0
        %1750 = vmatpush1.bf16.msra.mxu0 %v955
        %1751 = vmatprep.subr.bf16.mxu0 0
        %1752 = vmatpush1.bf16.msra.mxu0 0
        %1753 = vmatprep.subr.bf16.mxu0 0
        %1754 = vmatpush1.bf16.msra.mxu0 0
        %1755 = vmatprep.subr.bf16.mxu0 0
        %1756 = vmatpush1.bf16.msra.mxu0 0
        %1757 = vmatprep.subr.bf16.mxu0 0
        %1758 = vmatpush1.bf16.msra.mxu0 0
        %1759 = vmatprep.subr.bf16.mxu0 0
        %1760 = vmatpush1.bf16.msra.mxu0 0
        %1761 = vmatprep.subr.bf16.mxu0 0
        %1762 = vmatpush1.bf16.msra.mxu0 0
        %1763 = vmatprep.subr.bf16.mxu0 0
        %1764 = vmatpush1.bf16.msra.mxu0 0
        %1765 = vmatprep.subr.bf16.mxu0 0
        %1766 = vmatpush1.bf16.msra.mxu0 0
        %1767 = vmatprep.subr.bf16.mxu0 0
        %1768 = vmatpush1.bf16.msra.mxu0 0
        %1769 = vmatprep.subr.bf16.mxu0 0
        %1770 = vmatpush1.bf16.msra.mxu0 0
        %1771 = vmatprep.subr.bf16.mxu0 0
        %1772 = vmatpush1.bf16.msra.mxu0 0
        %1773 = vmatprep.subr.bf16.mxu0 0
        %1774 = vmatpush1.bf16.msra.mxu0 0
        %1775 = vmatprep.subr.bf16.mxu0 0
        %1776 = vmatpush1.bf16.msra.mxu0 0
        %1777 = vmatprep.subr.bf16.mxu0 0
        %1778 = vmatpush1.bf16.msra.mxu0 0
        %1779 = vmatprep.subr.bf16.mxu0 0
        %1780 = vmatpush1.bf16.msra.mxu0 0
        %1781 = vmatprep.mubr.bf16.mxu0 0
        %1782 = vmatmul.mubr.bf16.gmra.mrb[0].mxu0 %v1747
        %v1783 = vpop.f32.mrb[0].mxu0
        %v1784 = vadd.f32 0.0, %v1783
        %v1785 = vpop.f32.mrb[0].mxu0
        %v1786 = vpop.f32.mrb[0].mxu0
        %v1787 = vadd.f32 0.0, %v1786
        %v1788 = vpop.f32.mrb[0].mxu0
        %1789 = vdwg.mxu0
        %v1791 = vsel %vm1341, %v1524, 0
        %1793 = vmatprep.subr.bf16.mxu0 0
        %1794 = vmatpush1.bf16.msra.mxu0 %v959
        %1795 = vmatprep.subr.bf16.mxu0 0
        %1796 = vmatpush1.bf16.msra.mxu0 0
        %1797 = vmatprep.subr.bf16.mxu0 0
        %1798 = vmatpush1.bf16.msra.mxu0 0
        %1799 = vmatprep.subr.bf16.mxu0 0
        %1800 = vmatpush1.bf16.msra.mxu0 0
        %1801 = vmatprep.subr.bf16.mxu0 0
        %1802 = vmatpush1.bf16.msra.mxu0 0
        %1803 = vmatprep.subr.bf16.mxu0 0
        %1804 = vmatpush1.bf16.msra.mxu0 0
        %1805 = vmatprep.subr.bf16.mxu0 0
        %1806 = vmatpush1.bf16.msra.mxu0 0
        %1807 = vmatprep.subr.bf16.mxu0 0
        %1808 = vmatpush1.bf16.msra.mxu0 0
        %1809 = vmatprep.subr.bf16.mxu0 0
        %1810 = vmatpush1.bf16.msra.mxu0 0
        %1811 = vmatprep.subr.bf16.mxu0 0
        %1812 = vmatpush1.bf16.msra.mxu0 0
        %1813 = vmatprep.subr.bf16.mxu0 0
        %1814 = vmatpush1.bf16.msra.mxu0 0
        %1815 = vmatprep.subr.bf16.mxu0 0
        %1816 = vmatpush1.bf16.msra.mxu0 0
        %1817 = vmatprep.subr.bf16.mxu0 0
        %1818 = vmatpush1.bf16.msra.mxu0 0
        %1819 = vmatprep.subr.bf16.mxu0 0
        %1820 = vmatpush1.bf16.msra.mxu0 0
        %1821 = vmatprep.subr.bf16.mxu0 0
        %1822 = vmatpush1.bf16.msra.mxu0 0
        %1823 = vmatprep.subr.bf16.mxu0 0
        %1824 = vmatpush1.bf16.msra.mxu0 0
        %1825 = vmatprep.mubr.bf16.mxu0 0
        %1826 = vmatmul.mubr.bf16.gmra.mrb[0].mxu0 %v1791
        %v1827 = vpop.f32.mrb[0].mxu0
        %v1828 = vadd.f32 0.0, %v1827
        %v1829 = vpop.f32.mrb[0].mxu0
        %v1830 = vpop.f32.mrb[0].mxu0
        %v1831 = vadd.f32 0.0, %v1830
        %v1832 = vpop.f32.mrb[0].mxu0
        %1833 = vdwg.mxu0
        %v1835 = vsel %vm1341, %v1525, 0
        %1837 = vmatprep.subr.bf16.mxu0 0
        %1838 = vmatpush1.bf16.msra.mxu0 %v961
        %1839 = vmatprep.subr.bf16.mxu0 0
        %1840 = vmatpush1.bf16.msra.mxu0 0
        %1841 = vmatprep.subr.bf16.mxu0 0
        %1842 = vmatpush1.bf16.msra.mxu0 0
        %1843 = vmatprep.subr.bf16.mxu0 0
        %1844 = vmatpush1.bf16.msra.mxu0 0
        %1845 = vmatprep.subr.bf16.mxu0 0
        %1846 = vmatpush1.bf16.msra.mxu0 0
        %1847 = vmatprep.subr.bf16.mxu0 0
        %1848 = vmatpush1.bf16.msra.mxu0 0
        %1849 = vmatprep.subr.bf16.mxu0 0
        %1850 = vmatpush1.bf16.msra.mxu0 0
        %1851 = vmatprep.subr.bf16.mxu0 0
        %1852 = vmatpush1.bf16.msra.mxu0 0
        %1853 = vmatprep.subr.bf16.mxu0 0
        %1854 = vmatpush1.bf16.msra.mxu0 0
        %1855 = vmatprep.subr.bf16.mxu0 0
        %1856 = vmatpush1.bf16.msra.mxu0 0
        %1857 = vmatprep.subr.bf16.mxu0 0
        %1858 = vmatpush1.bf16.msra.mxu0 0
        %1859 = vmatprep.subr.bf16.mxu0 0
        %1860 = vmatpush1.bf16.msra.mxu0 0
        %1861 = vmatprep.subr.bf16.mxu0 0
        %1862 = vmatpush1.bf16.msra.mxu0 0
        %1863 = vmatprep.subr.bf16.mxu0 0
        %1864 = vmatpush1.bf16.msra.mxu0 0
        %1865 = vmatprep.subr.bf16.mxu0 0
        %1866 = vmatpush1.bf16.msra.mxu0 0
        %1867 = vmatprep.subr.bf16.mxu0 0
        %1868 = vmatpush1.bf16.msra.mxu0 0
        %1869 = vmatprep.mubr.bf16.mxu0 0
        %1870 = vmatmul.mubr.bf16.gmra.mrb[0].mxu0 %v1835
        %v1871 = vpop.f32.mrb[0].mxu0
        %v1872 = vadd.f32 0.0, %v1871
        %v1873 = vpop.f32.mrb[0].mxu0
        %v1874 = vpop.f32.mrb[0].mxu0
        %v1875 = vadd.f32 0.0, %v1874
        %v1876 = vpop.f32.mrb[0].mxu0
        %1877 = vdwg.mxu0
        %1882 = vrot.lane.b32.xlu0 %v1652, 32
        %v1883 = vpop.permute.xlu0 %1882
        %1884 = vrot.lane.b32.xlu0 %v1655, 32
        %v1885 = vpop.permute.xlu0 %1884
        %1886 = vrot.lane.b32.xlu0 %v1696, 32
        %v1887 = vpop.permute.xlu0 %1886
        %1888 = vrot.lane.b32.xlu0 %v1699, 32
        %v1889 = vpop.permute.xlu0 %1888
        %1898 = vrot.lane.b32.xlu0 %v1740, 64
        %v1899 = vpop.permute.xlu0 %1898
        %1900 = vrot.lane.b32.xlu0 %v1743, 64
        %v1901 = vpop.permute.xlu0 %1900
        %1902 = vrot.lane.b32.xlu0 %v1784, 64
        %v1903 = vpop.permute.xlu0 %1902
        %1904 = vrot.lane.b32.xlu0 %v1787, 64
        %v1905 = vpop.permute.xlu0 %1904
        %1914 = vrot.lane.b32.xlu0 %v1828, 96
        %v1915 = vpop.permute.xlu0 %1914
        %1916 = vrot.lane.b32.xlu0 %v1831, 96
        %v1917 = vpop.permute.xlu0 %1916
        %1918 = vrot.lane.b32.xlu0 %v1872, 96
        %v1919 = vpop.permute.xlu0 %1918
        %1920 = vrot.lane.b32.xlu0 %v1875, 96
        %v1921 = vpop.permute.xlu0 %1920
        %v1926 = vsel %vm964, %v1564, %v1883
        %v1927 = vsel %vm964, %v1567, %v1885
        %v1928 = vsel %vm964, %v1608, %v1887
        %v1929 = vsel %vm964, %v1611, %v1889
        %vm1930 = vcmask 523264
        %v1931 = vsel %vm1930, %v1926, %v1899
        %v1932 = vsel %vm1930, %v1927, %v1901
        %v1933 = vsel %vm1930, %v1928, %v1903
        %v1934 = vsel %vm1930, %v1929, %v1905
        %vm1935 = vcmask 785408
        %v1936 = vsel %vm1935, %v1931, %v1915
        %v1937 = vsel %vm1935, %v1932, %v1917
        %v1938 = vsel %vm1935, %v1933, %v1919
        %v1939 = vsel %vm1935, %v1934, %v1921
        %v1940 = vpack.c.bf16 %v1937, %v1936
        %v1941 = vpack.c.bf16 %v1939, %v1938
        %v1942 = vld [vmem:[#allocation8] sm:$0xf]
        %v1943 = vld [vmem:[#allocation8 + $0x4] sm:$0xf]
        %v1944 = vld [vmem:[#allocation8 + $0x8] sm:$0xf]
        %v1945 = vld [vmem:[#allocation8 + $0xc] sm:$0xf]
        %v1946 = vld [vmem:[#allocation8 + $0x10] sm:$0xf]
        %v1947 = vld [vmem:[#allocation8 + $0x14] sm:$0xf]
        %v1948 = vld [vmem:[#allocation8 + $0x18] sm:$0xf]
        %v1949 = vld [vmem:[#allocation8 + $0x1c] sm:$0xf]
        %v1950 = vld [vmem:[#allocation8 + $0x20] sm:$0xf]
        %v1951 = vld [vmem:[#allocation8 + $0x24] sm:$0xf]
        %v1952 = vld [vmem:[#allocation8 + $0x28] sm:$0xf]
        %v1953 = vld [vmem:[#allocation8 + $0x2c] sm:$0xf]
        %v1954 = vld [vmem:[#allocation8 + $0x30] sm:$0xf]
        %v1955 = vld [vmem:[#allocation8 + $0x34] sm:$0xf]
        %v1956 = vld [vmem:[#allocation8 + $0x38] sm:$0xf]
        %v1957 = vld [vmem:[#allocation8 + $0x3c] sm:$0xf]
        %v1958 = vld [vmem:[#allocation10] sm:$0x1]
        %v1960 = vlaneseq
        %v1961 = vshrl.u32 %v1960, 7
        %v1962 = vsub.s32 0, %v1961
        %v1963 = vrot.slane %v1958, %v1962
        %v1981 = vunpack.c.l.b16 %v1942
        %v1982 = vunpack.c.l.b16 %v1943
        %v1983 = vunpack.c.l.b16 %v1944
        %v1984 = vunpack.c.l.b16 %v1945
        %v1985 = vunpack.c.l.b16 %v1946
        %v1986 = vunpack.c.l.b16 %v1947
        %v1987 = vunpack.c.l.b16 %v1948
        %v1988 = vunpack.c.l.b16 %v1949
        %v1989 = vunpack.c.l.b16 %v1950
        %v1990 = vunpack.c.l.b16 %v1951
        %v1991 = vunpack.c.l.b16 %v1952
        %v1992 = vunpack.c.l.b16 %v1953
        %v1993 = vunpack.c.l.b16 %v1954
        %v1994 = vunpack.c.l.b16 %v1955
        %v1995 = vunpack.c.l.b16 %v1956
        %v1996 = vunpack.c.l.b16 %v1957
        %v1997 = vpack.c.b16 %v1982, %v1981
        %v1998 = vpack.c.b16 %v1984, %v1983
        %v1999 = vpack.c.b16 %v1986, %v1985
        %v2000 = vpack.c.b16 %v1988, %v1987
        %v2001 = vpack.c.b16 %v1990, %v1989
        %v2002 = vpack.c.b16 %v1992, %v1991
        %v2003 = vpack.c.b16 %v1994, %v1993
        %v2004 = vpack.c.b16 %v1996, %v1995
        %2013 = vmatprep.subr.bf16.mxu0 0
        %2014 = vmatpush1.bf16.msra.mxu0 %v1997
        %2015 = vmatprep.subr.bf16.mxu0 0
        %2016 = vmatpush1.bf16.msra.mxu0 %v1998
        %2017 = vmatprep.subr.bf16.mxu0 0
        %2018 = vmatpush1.bf16.msra.mxu0 %v1999
        %2019 = vmatprep.subr.bf16.mxu0 0
        %2020 = vmatpush1.bf16.msra.mxu0 %v2000
        %2021 = vmatprep.subr.bf16.mxu0 0
        %2022 = vmatpush1.bf16.msra.mxu0 %v2001
        %2023 = vmatprep.subr.bf16.mxu0 0
        %2024 = vmatpush1.bf16.msra.mxu0 %v2002
        %2025 = vmatprep.subr.bf16.mxu0 0
        %2026 = vmatpush1.bf16.msra.mxu0 %v2003
        %2027 = vmatprep.subr.bf16.mxu0 0
        %2028 = vmatpush1.bf16.msra.mxu0 %v2004
        %2029 = vmatprep.subr.bf16.mxu0 0
        %2030 = vmatpush1.bf16.msra.mxu0 0
        %2031 = vmatprep.subr.bf16.mxu0 0
        %2032 = vmatpush1.bf16.msra.mxu0 0
        %2033 = vmatprep.subr.bf16.mxu0 0
        %2034 = vmatpush1.bf16.msra.mxu0 0
        %2035 = vmatprep.subr.bf16.mxu0 0
        %2036 = vmatpush1.bf16.msra.mxu0 0
        %2037 = vmatprep.subr.bf16.mxu0 0
        %2038 = vmatpush1.bf16.msra.mxu0 0
        %2039 = vmatprep.subr.bf16.mxu0 0
        %2040 = vmatpush1.bf16.msra.mxu0 0
        %2041 = vmatprep.subr.bf16.mxu0 0
        %2042 = vmatpush1.bf16.msra.mxu0 0
        %2043 = vmatprep.subr.bf16.mxu0 0
        %2044 = vmatpush1.bf16.msra.mxu0 0
        %2045 = vmatprep.mubr.bf16.mxu0 0
        %2046 = vmatmul.mubr.bf16.gmra.mrb[0].mxu0 %v1940
        %v2047 = vpop.f32.mrb[0].mxu0
        %v2048 = vadd.f32 %v1963, %v2047
        %v2049 = vpop.f32.mrb[0].mxu0
        %v2050 = vpop.f32.mrb[0].mxu0
        %v2051 = vadd.f32 %v1963, %v2050
        %v2052 = vpop.f32.mrb[0].mxu0
        %2053 = vmatprep.mubr.bf16.mxu0 0
        %2054 = vmatmul.mubr.bf16.gmra.mrb[0].mxu0 %v1941
        %v2055 = vpop.f32.mrb[0].mxu0
        %v2056 = vadd.f32 %v1963, %v2055
        %v2057 = vpop.f32.mrb[0].mxu0
        %v2058 = vpop.f32.mrb[0].mxu0
        %v2059 = vadd.f32 %v1963, %v2058
        %v2060 = vpop.f32.mrb[0].mxu0
        %2061 = vdwg.mxu0
        %v2062 = vadd.f32 %v621, %v2048
        %v2063 = vadd.f32 %v622, %v2051
        %v2064 = vadd.f32 %v623, %v2056
        %v2065 = vadd.f32 %v624, %v2059
        %v2066 = vld [vmem:[#allocation11] sm:$0x1]
        %v2067 = vld [vmem:[#allocation13] sm:$0x1]
        %2068 = vadd.xlane.f32.xlu0 %v2062
        %v2069 = vpop.xlane.xlu0 %2068
        %2070 = vadd.xlane.f32.xlu0 %v2063
        %v2071 = vpop.xlane.xlu0 %2070
        %2072 = vadd.xlane.f32.xlu0 %v2064
        %v2073 = vpop.xlane.xlu0 %2072
        %2074 = vadd.xlane.f32.xlu0 %v2065
        %v2075 = vpop.xlane.xlu0 %2074
        %v2076 = vrcp.pop 128.0
        %v2077 = vmul.f32 %v2069, %v2076
        %v2078 = vmul.f32 %v2071, %v2076
        %v2079 = vmul.f32 %v2073, %v2076
        %v2080 = vmul.f32 %v2075, %v2076
        %v2081 = vsub.f32 %v2062, %v2077
        %v2082 = vsub.f32 %v2063, %v2078
        %v2083 = vsub.f32 %v2064, %v2079
        %v2084 = vsub.f32 %v2065, %v2080
        %v2085 = vmul.f32 %v2081, %v2081
        %v2086 = vmul.f32 %v2082, %v2082
        %v2087 = vmul.f32 %v2083, %v2083
        %v2088 = vmul.f32 %v2084, %v2084
        %2089 = vadd.xlane.f32.xlu0 %v2085
        %v2090 = vpop.xlane.xlu0 %2089
        %2091 = vadd.xlane.f32.xlu0 %v2086
        %v2092 = vpop.xlane.xlu0 %2091
        %2093 = vadd.xlane.f32.xlu0 %v2087
        %v2094 = vpop.xlane.xlu0 %2093
        %2095 = vadd.xlane.f32.xlu0 %v2088
        %v2096 = vpop.xlane.xlu0 %2095
        %v2097 = vmul.f32 %v2090, %v2076
        %v2098 = vmul.f32 %v2092, %v2076
        %v2099 = vmul.f32 %v2094, %v2076
        %v2100 = vmul.f32 %v2096, %v2076
        %v2101 = vadd.f32 %v2097, 1e-05
        %v2102 = vadd.f32 %v2098, 1e-05
        %v2103 = vadd.f32 %v2099, 1e-05
        %v2104 = vadd.f32 %v2100, 1e-05
        %v2105 = vrsqrt.pop %v2101
        %v2106 = vrsqrt.pop %v2102
        %v2107 = vrsqrt.pop %v2103
        %v2108 = vrsqrt.pop %v2104
        %v2109 = vmul.f32 %v2081, %v2105
        %v2110 = vmul.f32 %v2082, %v2106
        %v2111 = vmul.f32 %v2083, %v2107
        %v2112 = vmul.f32 %v2084, %v2108
        %v2114 = vlaneseq
        %v2115 = vshrl.u32 %v2114, 7
        %v2116 = vsub.s32 0, %v2115
        %v2117 = vrot.slane %v2066, %v2116
        %v2119 = vmul.f32 %v2109, %v2117
        %v2120 = vmul.f32 %v2110, %v2117
        %v2121 = vmul.f32 %v2111, %v2117
        %v2122 = vmul.f32 %v2112, %v2117
        %v2124 = vlaneseq
        %v2125 = vshrl.u32 %v2124, 7
        %v2126 = vsub.s32 0, %v2125
        %v2127 = vrot.slane %v2067, %v2126
        %v2129 = vadd.f32 %v2119, %v2127
        %v2130 = vadd.f32 %v2120, %v2127
        %v2131 = vadd.f32 %v2121, %v2127
        %v2132 = vadd.f32 %v2122, %v2127
        %v2133 = vpack.c.bf16 %v2130, %v2129
        %v2134 = vpack.c.bf16 %v2132, %v2131
        %v2135 = vld [vmem:[#allocation14] sm:$0xff]
        %v2136 = vld [vmem:[#allocation14 + $0x8] sm:$0xff]
        %v2137 = vld [vmem:[#allocation14 + $0x10] sm:$0xff]
        %v2138 = vld [vmem:[#allocation14 + $0x18] sm:$0xff]
        %v2139 = vld [vmem:[#allocation14 + $0x20] sm:$0xff]
        %v2140 = vld [vmem:[#allocation14 + $0x28] sm:$0xff]
        %v2141 = vld [vmem:[#allocation14 + $0x30] sm:$0xff]
        %v2142 = vld [vmem:[#allocation14 + $0x38] sm:$0xff]
        %v2143 = vld [vmem:[#allocation14 + $0x40] sm:$0xff]
        %v2144 = vld [vmem:[#allocation14 + $0x48] sm:$0xff]
        %v2145 = vld [vmem:[#allocation14 + $0x50] sm:$0xff]
        %v2146 = vld [vmem:[#allocation14 + $0x58] sm:$0xff]
        %v2147 = vld [vmem:[#allocation14 + $0x60] sm:$0xff]
        %v2148 = vld [vmem:[#allocation14 + $0x68] sm:$0xff]
        %v2149 = vld [vmem:[#allocation14 + $0x70] sm:$0xff]
        %v2150 = vld [vmem:[#allocation14 + $0x78] sm:$0xff]
        %v2151 = vld [vmem:[#allocation16] sm:$0x3]
        %v2153 = vlaneseq
        %v2154 = vshrl.u32 %v2153, 7
        %v2155 = vsub.s32 0, %v2154
        %v2156 = vrot.slane %v2151, %v2155
        %v2157 = vlaneseq
        %v2158 = vshrl.u32 %v2157, 7
        %v2159 = vsub.s32 1, %v2158
        %v2160 = vrot.slane %v2151, %v2159
        %v2179 = vunpack.c.l.b16 %v2135
        %v2180 = vunpack.c.h.b16 %v2135
        %v2181 = vunpack.c.l.b16 %v2136
        %v2182 = vunpack.c.h.b16 %v2136
        %v2183 = vunpack.c.l.b16 %v2137
        %v2184 = vunpack.c.h.b16 %v2137
        %v2185 = vunpack.c.l.b16 %v2138
        %v2186 = vunpack.c.h.b16 %v2138
        %v2187 = vunpack.c.l.b16 %v2139
        %v2188 = vunpack.c.h.b16 %v2139
        %v2189 = vunpack.c.l.b16 %v2140
        %v2190 = vunpack.c.h.b16 %v2140
        %v2191 = vunpack.c.l.b16 %v2141
        %v2192 = vunpack.c.h.b16 %v2141
        %v2193 = vunpack.c.l.b16 %v2142
        %v2194 = vunpack.c.h.b16 %v2142
        %v2195 = vunpack.c.l.b16 %v2143
        %v2196 = vunpack.c.h.b16 %v2143
        %v2197 = vunpack.c.l.b16 %v2144
        %v2198 = vunpack.c.h.b16 %v2144
        %v2199 = vunpack.c.l.b16 %v2145
        %v2200 = vunpack.c.h.b16 %v2145
        %v2201 = vunpack.c.l.b16 %v2146
        %v2202 = vunpack.c.h.b16 %v2146
        %v2203 = vunpack.c.l.b16 %v2147
        %v2204 = vunpack.c.h.b16 %v2147
        %v2205 = vunpack.c.l.b16 %v2148
        %v2206 = vunpack.c.h.b16 %v2148
        %v2207 = vunpack.c.l.b16 %v2149
        %v2208 = vunpack.c.h.b16 %v2149
        %v2209 = vunpack.c.l.b16 %v2150
        %v2210 = vunpack.c.h.b16 %v2150
        %v2211 = vpack.c.b16 %v2181, %v2179
        %v2212 = vpack.c.b16 %v2182, %v2180
        %v2213 = vpack.c.b16 %v2185, %v2183
        %v2214 = vpack.c.b16 %v2186, %v2184
        %v2215 = vpack.c.b16 %v2189, %v2187
        %v2216 = vpack.c.b16 %v2190, %v2188
        %v2217 = vpack.c.b16 %v2193, %v2191
        %v2218 = vpack.c.b16 %v2194, %v2192
        %v2219 = vpack.c.b16 %v2197, %v2195
        %v2220 = vpack.c.b16 %v2198, %v2196
        %v2221 = vpack.c.b16 %v2201, %v2199
        %v2222 = vpack.c.b16 %v2202, %v2200
        %v2223 = vpack.c.b16 %v2205, %v2203
        %v2224 = vpack.c.b16 %v2206, %v2204
        %v2225 = vpack.c.b16 %v2209, %v2207
        %v2226 = vpack.c.b16 %v2210, %v2208
        %2243 = vmatprep.subr.bf16.mxu0 %v2212
        %2244 = vmatpush1.bf16.msra.mxu0 %v2211
        %2245 = vmatprep.subr.bf16.mxu0 %v2214
        %2246 = vmatpush1.bf16.msra.mxu0 %v2213
        %2247 = vmatprep.subr.bf16.mxu0 %v2216
        %2248 = vmatpush1.bf16.msra.mxu0 %v2215
        %2249 = vmatprep.subr.bf16.mxu0 %v2218
        %2250 = vmatpush1.bf16.msra.mxu0 %v2217
        %2251 = vmatprep.subr.bf16.mxu0 %v2220
        %2252 = vmatpush1.bf16.msra.mxu0 %v2219
        %2253 = vmatprep.subr.bf16.mxu0 %v2222
        %2254 = vmatpush1.bf16.msra.mxu0 %v2221
        %2255 = vmatprep.subr.bf16.mxu0 %v2224
        %2256 = vmatpush1.bf16.msra.mxu0 %v2223
        %2257 = vmatprep.subr.bf16.mxu0 %v2226
        %2258 = vmatpush1.bf16.msra.mxu0 %v2225
        %2259 = vmatprep.subr.bf16.mxu0 0
        %2260 = vmatpush1.bf16.msra.mxu0 0
        %2261 = vmatprep.subr.bf16.mxu0 0
        %2262 = vmatpush1.bf16.msra.mxu0 0
        %2263 = vmatprep.subr.bf16.mxu0 0
        %2264 = vmatpush1.bf16.msra.mxu0 0
        %2265 = vmatprep.subr.bf16.mxu0 0
        %2266 = vmatpush1.bf16.msra.mxu0 0
        %2267 = vmatprep.subr.bf16.mxu0 0
        %2268 = vmatpush1.bf16.msra.mxu0 0
        %2269 = vmatprep.subr.bf16.mxu0 0
        %2270 = vmatpush1.bf16.msra.mxu0 0
        %2271 = vmatprep.subr.bf16.mxu0 0
        %2272 = vmatpush1.bf16.msra.mxu0 0
        %2273 = vmatprep.subr.bf16.mxu0 0
        %2274 = vmatpush1.bf16.msra.mxu0 0
        %2275 = vmatprep.mubr.bf16.mxu0 0
        %2276 = vmatmul.mubr.bf16.gmra.mrb[0].mxu0 %v2133
        %v2277 = vpop.f32.mrb[0].mxu0
        %v2278 = vadd.f32 %v2156, %v2277
        %v2279 = vpop.f32.mrb[0].mxu0
        %v2280 = vadd.f32 %v2160, %v2279
        %v2281 = vpop.f32.mrb[0].mxu0
        %v2282 = vadd.f32 %v2156, %v2281
        %v2283 = vpop.f32.mrb[0].mxu0
        %v2284 = vadd.f32 %v2160, %v2283
        %2285 = vmatprep.mubr.bf16.mxu0 0
        %2286 = vmatmul.mubr.bf16.gmra.mrb[0].mxu0 %v2134
        %v2287 = vpop.f32.mrb[0].mxu0
        %v2288 = vadd.f32 %v2156, %v2287
        %v2289 = vpop.f32.mrb[0].mxu0
        %v2290 = vadd.f32 %v2160, %v2289
        %v2291 = vpop.f32.mrb[0].mxu0
        %v2292 = vadd.f32 %v2156, %v2291
        %v2293 = vpop.f32.mrb[0].mxu0
        %v2294 = vadd.f32 %v2160, %v2293
        %2295 = vdwg.mxu0
        %v2296 = vmul.f32 %v2278, 0.5
        %v2297 = vmul.f32 %v2280, 0.5
        %v2298 = vmul.f32 %v2282, 0.5
        %v2299 = vmul.f32 %v2284, 0.5
        %v2300 = vmul.f32 %v2288, 0.5
        %v2301 = vmul.f32 %v2290, 0.5
        %v2302 = vmul.f32 %v2292, 0.5
        %v2303 = vmul.f32 %v2294, 0.5
        %v2304 = vmul.f32 %v2278, 0.70710677
        %v2305 = vmul.f32 %v2280, 0.70710677
        %v2306 = vmul.f32 %v2282, 0.70710677
        %v2307 = vmul.f32 %v2284, 0.70710677
        %v2308 = vmul.f32 %v2288, 0.70710677
        %v2309 = vmul.f32 %v2290, 0.70710677
        %v2310 = vmul.f32 %v2292, 0.70710677
        %v2311 = vmul.f32 %v2294, 0.70710677
        %v2312 = verf.f32.pop %v2304
        %v2313 = verf.f32.pop %v2305
        %v2314 = verf.f32.pop %v2306
        %v2315 = verf.f32.pop %v2307
        %v2316 = verf.f32.pop %v2308
        %v2317 = verf.f32.pop %v2309
        %v2318 = verf.f32.pop %v2310
        %v2319 = verf.f32.pop %v2311
        %v2320 = vadd.f32 %v2312, 1.0
        %v2321 = vadd.f32 %v2313, 1.0
        %v2322 = vadd.f32 %v2314, 1.0
        %v2323 = vadd.f32 %v2315, 1.0
        %v2324 = vadd.f32 %v2316, 1.0
        %v2325 = vadd.f32 %v2317, 1.0
        %v2326 = vadd.f32 %v2318, 1.0
        %v2327 = vadd.f32 %v2319, 1.0
        %v2328 = vmul.f32 %v2296, %v2320
        %v2329 = vmul.f32 %v2297, %v2321
        %v2330 = vmul.f32 %v2298, %v2322
        %v2331 = vmul.f32 %v2299, %v2323
        %v2332 = vmul.f32 %v2300, %v2324
        %v2333 = vmul.f32 %v2301, %v2325
        %v2334 = vmul.f32 %v2302, %v2326
        %v2335 = vmul.f32 %v2303, %v2327
        %v2336 = vpack.c.bf16 %v2330, %v2328
        %v2337 = vpack.c.bf16 %v2331, %v2329
        %v2338 = vpack.c.bf16 %v2334, %v2332
        %v2339 = vpack.c.bf16 %v2335, %v2333
        %v2340 = vld [vmem:[#allocation17] sm:$0xf]
        %v2341 = vld [vmem:[#allocation17 + $0x4] sm:$0xf]
        %v2342 = vld [vmem:[#allocation17 + $0x8] sm:$0xf]
        %v2343 = vld [vmem:[#allocation17 + $0xc] sm:$0xf]
        %v2344 = vld [vmem:[#allocation17 + $0x10] sm:$0xf]
        %v2345 = vld [vmem:[#allocation17 + $0x14] sm:$0xf]
        %v2346 = vld [vmem:[#allocation17 + $0x18] sm:$0xf]
        %v2347 = vld [vmem:[#allocation17 + $0x1c] sm:$0xf]
        %v2348 = vld [vmem:[#allocation17 + $0x20] sm:$0xf]
        %v2349 = vld [vmem:[#allocation17 + $0x24] sm:$0xf]
        %v2350 = vld [vmem:[#allocation17 + $0x28] sm:$0xf]
        %v2351 = vld [vmem:[#allocation17 + $0x2c] sm:$0xf]
        %v2352 = vld [vmem:[#allocation17 + $0x30] sm:$0xf]
        %v2353 = vld [vmem:[#allocation17 + $0x34] sm:$0xf]
        %v2354 = vld [vmem:[#allocation17 + $0x38] sm:$0xf]
        %v2355 = vld [vmem:[#allocation17 + $0x3c] sm:$0xf]
        %v2356 = vld [vmem:[#allocation17 + $0x40] sm:$0xf]
        %v2357 = vld [vmem:[#allocation17 + $0x44] sm:$0xf]
        %v2358 = vld [vmem:[#allocation17 + $0x48] sm:$0xf]
        %v2359 = vld [vmem:[#allocation17 + $0x4c] sm:$0xf]
        %v2360 = vld [vmem:[#allocation17 + $0x50] sm:$0xf]
        %v2361 = vld [vmem:[#allocation17 + $0x54] sm:$0xf]
        %v2362 = vld [vmem:[#allocation17 + $0x58] sm:$0xf]
        %v2363 = vld [vmem:[#allocation17 + $0x5c] sm:$0xf]
        %v2364 = vld [vmem:[#allocation17 + $0x60] sm:$0xf]
        %v2365 = vld [vmem:[#allocation17 + $0x64] sm:$0xf]
        %v2366 = vld [vmem:[#allocation17 + $0x68] sm:$0xf]
        %v2367 = vld [vmem:[#allocation17 + $0x6c] sm:$0xf]
        %v2368 = vld [vmem:[#allocation17 + $0x70] sm:$0xf]
        %v2369 = vld [vmem:[#allocation17 + $0x74] sm:$0xf]
        %v2370 = vld [vmem:[#allocation17 + $0x78] sm:$0xf]
        %v2371 = vld [vmem:[#allocation17 + $0x7c] sm:$0xf]
        %v2372 = vld [vmem:[#allocation19] sm:$0x1]
        %v2374 = vlaneseq
        %v2375 = vshrl.u32 %v2374, 7
        %v2376 = vsub.s32 0, %v2375
        %v2377 = vrot.slane %v2372, %v2376
        %v2411 = vunpack.c.l.b16 %v2340
        %v2412 = vunpack.c.l.b16 %v2341
        %v2413 = vunpack.c.l.b16 %v2342
        %v2414 = vunpack.c.l.b16 %v2343
        %v2415 = vunpack.c.l.b16 %v2344
        %v2416 = vunpack.c.l.b16 %v2345
        %v2417 = vunpack.c.l.b16 %v2346
        %v2418 = vunpack.c.l.b16 %v2347
        %v2419 = vunpack.c.l.b16 %v2348
        %v2420 = vunpack.c.l.b16 %v2349
        %v2421 = vunpack.c.l.b16 %v2350
        %v2422 = vunpack.c.l.b16 %v2351
        %v2423 = vunpack.c.l.b16 %v2352
        %v2424 = vunpack.c.l.b16 %v2353
        %v2425 = vunpack.c.l.b16 %v2354
        %v2426 = vunpack.c.l.b16 %v2355
        %v2427 = vunpack.c.l.b16 %v2356
        %v2428 = vunpack.c.l.b16 %v2357
        %v2429 = vunpack.c.l.b16 %v2358
        %v2430 = vunpack.c.l.b16 %v2359
        %v2431 = vunpack.c.l.b16 %v2360
        %v2432 = vunpack.c.l.b16 %v2361
        %v2433 = vunpack.c.l.b16 %v2362
        %v2434 = vunpack.c.l.b16 %v2363
        %v2435 = vunpack.c.l.b16 %v2364
        %v2436 = vunpack.c.l.b16 %v2365
        %v2437 = vunpack.c.l.b16 %v2366
        %v2438 = vunpack.c.l.b16 %v2367
        %v2439 = vunpack.c.l.b16 %v2368
        %v2440 = vunpack.c.l.b16 %v2369
        %v2441 = vunpack.c.l.b16 %v2370
        %v2442 = vunpack.c.l.b16 %v2371
        %v2443 = vpack.c.b16 %v2412, %v2411
        %v2444 = vpack.c.b16 %v2414, %v2413
        %v2445 = vpack.c.b16 %v2416, %v2415
        %v2446 = vpack.c.b16 %v2418, %v2417
        %v2447 = vpack.c.b16 %v2420, %v2419
        %v2448 = vpack.c.b16 %v2422, %v2421
        %v2449 = vpack.c.b16 %v2424, %v2423
        %v2450 = vpack.c.b16 %v2426, %v2425
        %v2451 = vpack.c.b16 %v2428, %v2427
        %v2452 = vpack.c.b16 %v2430, %v2429
        %v2453 = vpack.c.b16 %v2432, %v2431
        %v2454 = vpack.c.b16 %v2434, %v2433
        %v2455 = vpack.c.b16 %v2436, %v2435
        %v2456 = vpack.c.b16 %v2438, %v2437
        %v2457 = vpack.c.b16 %v2440, %v2439
        %v2458 = vpack.c.b16 %v2442, %v2441
        %2475 = vmatprep.subr.bf16.mxu0 0
        %2476 = vmatpush1.bf16.msra.mxu0 %v2443
        %2477 = vmatprep.subr.bf16.mxu0 0
        %2478 = vmatpush1.bf16.msra.mxu0 %v2444
        %2479 = vmatprep.subr.bf16.mxu0 0
        %2480 = vmatpush1.bf16.msra.mxu0 %v2445
        %2481 = vmatprep.subr.bf16.mxu0 0
        %2482 = vmatpush1.bf16.msra.mxu0 %v2446
        %2483 = vmatprep.subr.bf16.mxu0 0
        %2484 = vmatpush1.bf16.msra.mxu0 %v2447
        %2485 = vmatprep.subr.bf16.mxu0 0
        %2486 = vmatpush1.bf16.msra.mxu0 %v2448
        %2487 = vmatprep.subr.bf16.mxu0 0
        %2488 = vmatpush1.bf16.msra.mxu0 %v2449
        %2489 = vmatprep.subr.bf16.mxu0 0
        %2490 = vmatpush1.bf16.msra.mxu0 %v2450
        %2491 = vmatprep.subr.bf16.mxu0 0
        %2492 = vmatpush1.bf16.msra.mxu0 %v2451
        %2493 = vmatprep.subr.bf16.mxu0 0
        %2494 = vmatpush1.bf16.msra.mxu0 %v2452
        %2495 = vmatprep.subr.bf16.mxu0 0
        %2496 = vmatpush1.bf16.msra.mxu0 %v2453
        %2497 = vmatprep.subr.bf16.mxu0 0
        %2498 = vmatpush1.bf16.msra.mxu0 %v2454
        %2499 = vmatprep.subr.bf16.mxu0 0
        %2500 = vmatpush1.bf16.msra.mxu0 %v2455
        %2501 = vmatprep.subr.bf16.mxu0 0
        %2502 = vmatpush1.bf16.msra.mxu0 %v2456
        %2503 = vmatprep.subr.bf16.mxu0 0
        %2504 = vmatpush1.bf16.msra.mxu0 %v2457
        %2505 = vmatprep.subr.bf16.mxu0 0
        %2506 = vmatpush1.bf16.msra.mxu0 %v2458
        %2507 = vmatprep.mubr.bf16.mxu0 %v2337
        %2508 = vmatmul.mubr.bf16.gmra.mrb[0].mxu0 %v2336
        %v2509 = vpop.f32.mrb[0].mxu0
        %v2510 = vadd.f32 %v2377, %v2509
        %v2511 = vpop.f32.mrb[0].mxu0
        %v2512 = vpop.f32.mrb[0].mxu0
        %v2513 = vadd.f32 %v2377, %v2512
        %v2514 = vpop.f32.mrb[0].mxu0
        %2515 = vmatprep.mubr.bf16.mxu0 %v2339
        %2516 = vmatmul.mubr.bf16.gmra.mrb[0].mxu0 %v2338
        %v2517 = vpop.f32.mrb[0].mxu0
        %v2518 = vadd.f32 %v2377, %v2517
        %v2519 = vpop.f32.mrb[0].mxu0
        %v2520 = vpop.f32.mrb[0].mxu0
        %v2521 = vadd.f32 %v2377, %v2520
        %v2522 = vpop.f32.mrb[0].mxu0
        %2523 = vdwg.mxu0
        %v2524 = vadd.f32 %v2129, %v2510
        %v2525 = vadd.f32 %v2130, %v2513
        %v2526 = vadd.f32 %v2131, %v2518
        %v2527 = vadd.f32 %v2132, %v2521
        %v2528 = vld [vmem:[#allocation20] sm:$0x1]
        %v2529 = vld [vmem:[#allocation22] sm:$0x1]
        %2530 = vadd.xlane.f32.xlu0 %v2524
        %v2531 = vpop.xlane.xlu0 %2530
        %2532 = vadd.xlane.f32.xlu0 %v2525
        %v2533 = vpop.xlane.xlu0 %2532
        %2534 = vadd.xlane.f32.xlu0 %v2526
        %v2535 = vpop.xlane.xlu0 %2534
        %2536 = vadd.xlane.f32.xlu0 %v2527
        %v2537 = vpop.xlane.xlu0 %2536
        %v2538 = vmul.f32 %v2531, %v2076
        %v2539 = vmul.f32 %v2533, %v2076
        %v2540 = vmul.f32 %v2535, %v2076
        %v2541 = vmul.f32 %v2537, %v2076
        %v2542 = vsub.f32 %v2524, %v2538
        %v2543 = vsub.f32 %v2525, %v2539
        %v2544 = vsub.f32 %v2526, %v2540
        %v2545 = vsub.f32 %v2527, %v2541
        %v2546 = vmul.f32 %v2542, %v2542
        %v2547 = vmul.f32 %v2543, %v2543
        %v2548 = vmul.f32 %v2544, %v2544
        %v2549 = vmul.f32 %v2545, %v2545
        %2550 = vadd.xlane.f32.xlu0 %v2546
        %v2551 = vpop.xlane.xlu0 %2550
        %2552 = vadd.xlane.f32.xlu0 %v2547
        %v2553 = vpop.xlane.xlu0 %2552
        %2554 = vadd.xlane.f32.xlu0 %v2548
        %v2555 = vpop.xlane.xlu0 %2554
        %2556 = vadd.xlane.f32.xlu0 %v2549
        %v2557 = vpop.xlane.xlu0 %2556
        %v2558 = vmul.f32 %v2551, %v2076
        %v2559 = vmul.f32 %v2553, %v2076
        %v2560 = vmul.f32 %v2555, %v2076
        %v2561 = vmul.f32 %v2557, %v2076
        %v2562 = vadd.f32 %v2558, 1e-05
        %v2563 = vadd.f32 %v2559, 1e-05
        %v2564 = vadd.f32 %v2560, 1e-05
        %v2565 = vadd.f32 %v2561, 1e-05
        %v2566 = vrsqrt.pop %v2562
        %v2567 = vrsqrt.pop %v2563
        %v2568 = vrsqrt.pop %v2564
        %v2569 = vrsqrt.pop %v2565
        %v2570 = vmul.f32 %v2542, %v2566
        %v2571 = vmul.f32 %v2543, %v2567
        %v2572 = vmul.f32 %v2544, %v2568
        %v2573 = vmul.f32 %v2545, %v2569
        %v2575 = vlaneseq
        %v2576 = vshrl.u32 %v2575, 7
        %v2577 = vsub.s32 0, %v2576
        %v2578 = vrot.slane %v2528, %v2577
        %v2580 = vmul.f32 %v2570, %v2578
        %v2581 = vmul.f32 %v2571, %v2578
        %v2582 = vmul.f32 %v2572, %v2578
        %v2583 = vmul.f32 %v2573, %v2578
        %v2585 = vlaneseq
        %v2586 = vshrl.u32 %v2585, 7
        %v2587 = vsub.s32 0, %v2586
        %v2588 = vrot.slane %v2529, %v2587
        %v2590 = vadd.f32 %v2580, %v2588
        %v2591 = vadd.f32 %v2581, %v2588
        %v2592 = vadd.f32 %v2582, %v2588
        %v2593 = vadd.f32 %v2583, %v2588
        %2594 = vst [vmem:[%s617] sm:$0xff] %v2590
        %2595 = vst [vmem:[%s617 + $0x8] sm:$0xff] %v2591
        %2596 = vst [vmem:[%s617 + $0x10] sm:$0xff] %v2592
        %2597 = vst [vmem:[%s617 + $0x18] sm:$0xff] %v2593
        %s2598 = sand.u32 %s322, 1
        %s2599 = scalar_lea.sflag [#allocation4], %s2598
        %s2600 = sand.u32 %s322, 1
        %s2601 = smul.addr %s2600, 32
        %s2602 = scalar_lea.vmem [#allocation23], %s2601
        // Predicated region
        $region125: #{tpu_custom_call.1} parent=71 // pred_check
          %p2603 = pneg %p332
        $region126: #{tpu_custom_call.1} parent=71 // pred_check_branch
          %2605 = sbr.rel (%p2603) target = $region128
        $region127: #{tpu_custom_call.1} parent=71 // pred_region
          %s2606 = smul.u32 2, %s36
          %s2608 = ssub.s32 512, 512
          %2609 = vsyncadd %s2599, %s2608
          %s2610 = smul.addr %s2606, 2
          %s2611 = smul.addr %s2610, 128
          %s2612 = scalar_lea.hbm %s13, %s2611
          %s2613 = sshll.u32 %s2602, 4
          %s2614 = int_to_ptr.vmem [resolvable:$true] %s2613
          %2619 = dma.vmem_to_hbm [thread:$0]  %s2614, 512, %s2612, %s2599, 128, 128, 8
        $region128: #{tpu_custom_call.1} parent=71 // pred_fallthru
          _
      $region72: #{tpu_custom_call.1} parent=5 // pred_fallthru
        _
      %p2620 = scmp.le.s32.totalorder 2, %s31
      // Predicated region
      $region129: #{tpu_custom_call.1} parent=5 // pred_check
        %p2621 = pneg %p2620
      $region130: #{tpu_custom_call.1} parent=5 // pred_check_branch
        %2623 = sbr.rel (%p2621) target = $region132
      $region131: #{tpu_custom_call.1} parent=5 // pred_region
        %s2624 = ssub.s32 %s31, 2
        // Predicated region
        $region133: #{tpu_custom_call.1} parent=131 // pred_check
          %p2625 = pneg %p338
        $region134: #{tpu_custom_call.1} parent=131 // pred_check_branch
          %2627 = sbr.rel (%p2625) target = $region136
        $region135: #{tpu_custom_call.1} parent=131 // pred_region
          %s2628 = sand.u32 %s323, 1
          %s2629 = scalar_lea.sflag [#allocation4], %s2628
          %s2630 = sand.u32 %s323, 1
          %s2631 = smul.addr %s2630, 32
          %s2632 = scalar_lea.vmem [#allocation23], %s2631
          %2633 = dma.done %s2629, 512
        $region136: #{tpu_custom_call.1} parent=131 // pred_fallthru
          _
      $region132: #{tpu_custom_call.1} parent=5 // pred_fallthru
        _
    $region6: #{tpu_custom_call.1} parent=1 // loop_footer
      %s35 = sadd.s32 1, %s31
    $region7: #{tpu_custom_call.1} parent=1 // loop_footer_branch
      %30 = sbr.rel target = $region3
    $region8: #{tpu_custom_call.1} parent=1 // loop_exit
      _
    %2634 = vsyncpa [#allocation3], 1
    %s2635 = scalar_lea.sflag [#allocation3], 1
    %2636 = vsyncpa %s2635, 1
    %2637 = vsyncpa [#allocation6], 1
    %2638 = vsyncpa [#allocation9], 1
    %2639 = vsyncpa [#allocation12], 1
    %2640 = vsyncpa [#allocation15], 1
    %2641 = vsyncpa [#allocation18], 1
    %2642 = vsyncpa [#allocation21], 1
    %2643 = vsyncpa [#allocation4], 1
    %s2644 = scalar_lea.sflag [#allocation4], 1
    %2645 = vsyncpa %s2644, 1

</llo_original>
